<compile_context>
chip_gen: v7x
topology: tpu7x:2x2x1
jax: 0.10.0
libtpu: 0.0.40
codegen_flags: <defaults>
</compile_context>

<pallas_src>
import jax
import jax.numpy as jnp
from jax import lax
from jax.experimental import pallas as pl
from jax.experimental.pallas import tpu as pltpu


def _pad_value(dtype):
    dtype = jnp.dtype(dtype)
    if jnp.issubdtype(dtype, jnp.floating):
        return jnp.asarray(-jnp.inf, dtype=dtype)
    return jnp.asarray(jnp.iinfo(dtype).min, dtype=dtype)


def spp_kernel(x_ref, o_ref):
    # x_ref : (1, H, W, Cb)     NHWC channel block (C on the 128-lane axis)
    # o_ref : (1, 4, H, W, Cb)  planes: [identity, pool5, pool9(=5∘5), pool13(=5∘5∘5)]
    _, H, W, Cb = x_ref.shape
    dtype = x_ref.dtype
    neg = _pad_value(dtype)

    # Constant -inf halo rows for the H (leading-dim) shifts: built once per step.
    neg_rows = jnp.full((2, W, Cb), neg, dtype=dtype)
    # Column-index edge masks for the W (sublane) shifts: built once per step.
    col = lax.broadcasted_iota(jnp.int32, (W, Cb), 0)
    keep_plus = [col < (W - s) for s in (1, 2)]   # valid columns for the +s neighbour
    keep_minus = [col >= s for s in (1, 2)]       # valid columns for the -s neighbour

    def pool5(v):
        # Separable 5x5 stride-1 max pool with -inf padding on an (H, W, Cb) slab.
        # --- Row pass: shifts along the leading H axis are slice+concat with
        #     constant -inf rows (no VMEM round trip) followed by VPU max.
        r = v
        for s in (1, 2):
            if s < H:
                dn = jnp.concatenate([v[s:], neg_rows[:s]], axis=0)      # row i <- v[i+s]
                up = jnp.concatenate([neg_rows[:s], v[:H - s]], axis=0)  # row i <- v[i-s]
                r = jnp.maximum(r, jnp.maximum(dn, up))
        # --- Column pass: sublane-axis shifts via the XLU roll slot (idle in
        #     this kernel) + VPU edge masks -- replaces the old cbuf round trip.
        c = r
        for i, s in enumerate((1, 2)):
            if s < W:
                # pltpu.roll(x, k, axis)[j] == x[(j - k) mod W]  (jnp.roll semantics)
                plus = pltpu.roll(r, shift=W - s, axis=1)    # col j <- r[j+s] (wraps at right edge)
                minus = pltpu.roll(r, shift=s, axis=1)       # col j <- r[j-s] (wraps at left edge)
                plus = jnp.where(keep_plus[i], plus, neg)
                minus = jnp.where(keep_minus[i], minus, neg)
                c = jnp.maximum(c, jnp.maximum(plus, minus))
        return c

    x = x_ref[0]
    o_ref[0, 0] = x          # identity plane: straight lane-dense copy
    p1 = pool5(x)            # 5x5
    o_ref[0, 1] = p1
    p2 = pool5(p1)           # == 9x9
    o_ref[0, 2] = p2
    o_ref[0, 3] = pool5(p2)  # == 13x13


def _vmem_bytes(H, W, cb, itemsize):
    # Double-buffered input (1 plane) + output (4 planes) blocks, plus headroom
    # for the in-register / spilled pooling temporaries.
    io = 2 * (1 + 4) * H * W * cb * itemsize
    work = 4 * H * W * cb * itemsize
    return io + work


def _tpu_limits():
    """(pick_budget_bytes, vmem_limit_cap_bytes, min_grid_steps) per TPU generation."""
    vmem_cap = 64 << 20                      # conservative default (v7x-class)
    try:
        vmem_cap = int(pltpu.get_tpu_info().vmem_capacity_bytes)
    except Exception:
        pass
    if vmem_cap <= (64 << 20):
        # v7x-class: 64 MiB VMEM, 2 TensorCores -> want at least 2 grid steps.
        return 40 << 20, 48 << 20, 2
    # v5e / v6e-class: 128 MiB VMEM, 1 TensorCore -> favour bigger resident blocks.
    return 90 << 20, 100 << 20, 1


def _pick_channel_block(N, Cp, H, W, itemsize, budget, min_steps):
    # Cp is a multiple of 128.  Prefer the biggest lane-dense channel block that
    # fits the VMEM budget and still gives every TensorCore at least one step.
    cands = sorted({c for c in (Cp, 1024, 512, 384, 256, 128) if Cp % c == 0},
                   reverse=True)
    for cand in cands:
        if (_vmem_bytes(H, W, cand, itemsize) <= budget
                and N * (Cp // cand) >= min_steps):
            return cand
    # Fallback: smallest lane-dense block.  (H-tiling would be the next lever
    # for very large feature maps; YOLO SPP maps are small, so not needed.)
    return 128


def spp(x):
    """Spatial Pyramid Pooling. x: (N, C, H, W) -> (N, 4*C, H, W), torch.cat order."""
    N, C, H, W = x.shape

    # Channels on the lane axis: NCHW -> NHWC, padded up to a multiple of 128
    # lanes so every vector load/store in the kernel is unmasked and lane-dense.
    x_nhwc = jnp.transpose(x, (0, 2, 3, 1))
    Cp = ((C + 127) // 128) * 128
    if Cp != C:
        x_nhwc = jnp.pad(x_nhwc, ((0, 0), (0, 0), (0, 0), (0, Cp - C)))

    itemsize = jnp.dtype(x.dtype).itemsize
    budget, limit_cap, min_steps = _tpu_limits()
    cb = _pick_channel_block(N, Cp, H, W, itemsize, budget, min_steps)
    vmem_limit = int(min(max(_vmem_bytes(H, W, cb, itemsize) + (2 << 20), 16 << 20),
                         limit_cap))

    out = pl.pallas_call(
        spp_kernel,
        out_shape=jax.ShapeDtypeStruct((N, 4, H, W, Cp), x.dtype),
        grid=(N, Cp // cb),
        in_specs=[pl.BlockSpec((1, H, W, cb), lambda n, c: (n, 0, 0, c))],
        out_specs=pl.BlockSpec((1, 4, H, W, cb), lambda n, c: (n, 0, 0, 0, c)),
        compiler_params=pltpu.CompilerParams(
            dimension_semantics=("parallel", "parallel"),
            vmem_limit_bytes=vmem_limit),
    )(x_nhwc)

    if Cp != C:
        out = out[..., :C]
    # NOTE: an NHWC end-to-end pipeline should consume the kernel's
    # (N, 4, H, W, C) output directly and skip both wrapper transposes.
    # (N, 4, H, W, C) -> (N, 4, C, H, W) -> (N, 4*C, H, W): reproduces
    # torch.cat([x, x1, x2, x3], dim=1) channel ordering exactly.
    return jnp.transpose(out, (0, 1, 4, 2, 3)).reshape(N, 4 * C, H, W)


def _ref_spp(x):
    """Pure-JAX reference via lax.reduce_window (matches PyTorch max_pool2d semantics)."""
    def pool(x, k, p):
        return lax.reduce_window(
            x, -jnp.inf, lax.max,
            window_dimensions=(1, 1, k, k),
            window_strides=(1, 1, 1, 1),
            padding=((0, 0), (0, 0), (p, p), (p, p)))
    return jnp.concatenate([x, pool(x, 5, 2), pool(x, 9, 4), pool(x, 13, 6)], axis=1)


if __name__ == "__main__":
    key = jax.random.PRNGKey(0)
    x = jax.random.normal(key, (2, 4, 16, 16), dtype=jnp.float32)

    y = spp(x)
    jax.block_until_ready(y)

    y_ref = _ref_spp(x)
    assert y.shape == (2, 16, 16, 16), y.shape
    assert jnp.allclose(y, y_ref, atol=1e-6, rtol=1e-6), "mismatch vs reference"

    print("KERNEL_OK")
</pallas_src>

<mosaic_0001>
module attributes {stable_mosaic.version = 11 : i64} {
  func.func @spp_kernel(%arg0: i32, %arg1: i32, %arg2: memref<1x16x16x128xf32, #tpu.memory_space<vmem>>, %arg3: memref<1x4x16x16x128xf32, #tpu.memory_space<vmem>>) attributes {dimension_semantics = [#tpu.dimension_semantics<parallel>, #tpu.dimension_semantics<parallel>], iteration_bounds = array<i64: 2, 1>, scalar_prefetch = 0 : i64, scratch_operands = 0 : i64, tpu.core_type = #tpu.core_type<tc>, window_params = [{transform_indices = @transform_0, window_bounds = array<i64: 1, 16, 16, 128>}, {transform_indices = @transform_1, window_bounds = array<i64: 1, 4, 16, 16, 128>}]} {
    %cst = arith.constant 0xFF800000 : f32
    %0 = vector.broadcast %cst : f32 to vector<2x16x128xf32>
    %1 = tpu.iota {dimensions = array<i32: 0>} : vector<16x128xi32>
    %c15_i32 = arith.constant 15 : i32
    %2 = vector.broadcast %c15_i32 : i32 to vector<16x128xi32>
    %3 = arith.cmpi slt, %1, %2 : vector<16x128xi32>
    %c14_i32 = arith.constant 14 : i32
    %4 = vector.broadcast %c14_i32 : i32 to vector<16x128xi32>
    %5 = arith.cmpi slt, %1, %4 : vector<16x128xi32>
    %c1_i32 = arith.constant 1 : i32
    %6 = vector.broadcast %c1_i32 : i32 to vector<16x128xi32>
    %7 = arith.cmpi sge, %1, %6 : vector<16x128xi32>
    %c2_i32 = arith.constant 2 : i32
    %8 = vector.broadcast %c2_i32 : i32 to vector<16x128xi32>
    %9 = arith.cmpi sge, %1, %8 : vector<16x128xi32>
    %c0 = arith.constant 0 : index
    %c0_0 = arith.constant 0 : index
    %c0_1 = arith.constant 0 : index
    %c0_2 = arith.constant 0 : index
    %10 = vector.load %arg2[%c0, %c0_0, %c0_1, %c0_2] : memref<1x16x16x128xf32, #tpu.memory_space<vmem>>, vector<1x16x16x128xf32>
    %11 = vector.shape_cast %10 : vector<1x16x16x128xf32> to vector<16x16x128xf32>
    %c0_3 = arith.constant 0 : index
    %c0_4 = arith.constant 0 : index
    %c0_5 = arith.constant 0 : index
    %c0_6 = arith.constant 0 : index
    %c0_7 = arith.constant 0 : index
    %12 = vector.load %arg3[%c0_3, %c0_4, %c0_5, %c0_6, %c0_7] : memref<1x4x16x16x128xf32, #tpu.memory_space<vmem>>, vector<1x1x16x16x128xf32>
    %13 = vector.shape_cast %12 : vector<1x1x16x16x128xf32> to vector<16x16x128xf32>
    %14 = vector.shape_cast %11 : vector<16x16x128xf32> to vector<1x1x16x16x128xf32>
    tpu.vector_store %arg3[%c0_3, %c0_4, %c0_5, %c0_6, %c0_7], %14 {strides = array<i32>} : memref<1x4x16x16x128xf32, #tpu.memory_space<vmem>>, vector<1x1x16x16x128xf32>,
    %15 = vector.extract_strided_slice %11 {offsets = [1, 0, 0], sizes = [15, 16, 128], strides = [1, 1, 1]} : vector<16x16x128xf32> to vector<15x16x128xf32>
    %16 = vector.extract_strided_slice %0 {offsets = [0, 0, 0], sizes = [1, 16, 128], strides = [1, 1, 1]} : vector<2x16x128xf32> to vector<1x16x128xf32>
    %17 = tpu.concatenate %15, %16 in 0 : vector<15x16x128xf32>, vector<1x16x128xf32> -> vector<16x16x128xf32>
    %18 = vector.extract_strided_slice %0 {offsets = [0, 0, 0], sizes = [1, 16, 128], strides = [1, 1, 1]} : vector<2x16x128xf32> to vector<1x16x128xf32>
    %19 = vector.extract_strided_slice %11 {offsets = [0, 0, 0], sizes = [15, 16, 128], strides = [1, 1, 1]} : vector<16x16x128xf32> to vector<15x16x128xf32>
    %20 = tpu.concatenate %18, %19 in 0 : vector<1x16x128xf32>, vector<15x16x128xf32> -> vector<16x16x128xf32>
    %21 = arith.maximumf %17, %20 : vector<16x16x128xf32>
    %22 = arith.maximumf %11, %21 : vector<16x16x128xf32>
    %23 = vector.extract_strided_slice %11 {offsets = [2, 0, 0], sizes = [14, 16, 128], strides = [1, 1, 1]} : vector<16x16x128xf32> to vector<14x16x128xf32>
    %24 = tpu.concatenate %23, %0 in 0 : vector<14x16x128xf32>, vector<2x16x128xf32> -> vector<16x16x128xf32>
    %25 = vector.extract_strided_slice %11 {offsets = [0, 0, 0], sizes = [14, 16, 128], strides = [1, 1, 1]} : vector<16x16x128xf32> to vector<14x16x128xf32>
    %26 = tpu.concatenate %0, %25 in 0 : vector<2x16x128xf32>, vector<14x16x128xf32> -> vector<16x16x128xf32>
    %27 = arith.maximumf %24, %26 : vector<16x16x128xf32>
    %28 = arith.maximumf %22, %27 : vector<16x16x128xf32>
    %c15_i32_8 = arith.constant 15 : i32
    %29 = tpu.dynamic_rotate %28 by %c15_i32_8 dim 1 : vector<16x16x128xf32>, i32 -> vector<16x16x128xf32>
    %c1_i32_9 = arith.constant 1 : i32
    %30 = tpu.dynamic_rotate %28 by %c1_i32_9 dim 1 : vector<16x16x128xf32>, i32 -> vector<16x16x128xf32>
    %cst_10 = arith.constant 0xFF800000 : f32
    %31 = vector.shape_cast %3 : vector<16x128xi1> to vector<1x16x128xi1>
    %32 = vector.broadcast %31 : vector<1x16x128xi1> to vector<16x16x128xi1>
    %33 = vector.broadcast %cst_10 : f32 to vector<16x16x128xf32>
    %34 = arith.select %32, %29, %33 : vector<16x16x128xi1>, vector<16x16x128xf32>
    %cst_11 = arith.constant 0xFF800000 : f32
    %35 = vector.shape_cast %7 : vector<16x128xi1> to vector<1x16x128xi1>
    %36 = vector.broadcast %35 : vector<1x16x128xi1> to vector<16x16x128xi1>
    %37 = vector.broadcast %cst_11 : f32 to vector<16x16x128xf32>
    %38 = arith.select %36, %30, %37 : vector<16x16x128xi1>, vector<16x16x128xf32>
    %39 = arith.maximumf %34, %38 : vector<16x16x128xf32>
    %40 = arith.maximumf %28, %39 : vector<16x16x128xf32>
    %c14_i32_12 = arith.constant 14 : i32
    %41 = tpu.dynamic_rotate %28 by %c14_i32_12 dim 1 : vector<16x16x128xf32>, i32 -> vector<16x16x128xf32>
    %c2_i32_13 = arith.constant 2 : i32
    %42 = tpu.dynamic_rotate %28 by %c2_i32_13 dim 1 : vector<16x16x128xf32>, i32 -> vector<16x16x128xf32>
    %cst_14 = arith.constant 0xFF800000 : f32
    %43 = vector.shape_cast %5 : vector<16x128xi1> to vector<1x16x128xi1>
    %44 = vector.broadcast %43 : vector<1x16x128xi1> to vector<16x16x128xi1>
    %45 = vector.broadcast %cst_14 : f32 to vector<16x16x128xf32>
    %46 = arith.select %44, %41, %45 : vector<16x16x128xi1>, vector<16x16x128xf32>
    %cst_15 = arith.constant 0xFF800000 : f32
    %47 = vector.shape_cast %9 : vector<16x128xi1> to vector<1x16x128xi1>
    %48 = vector.broadcast %47 : vector<1x16x128xi1> to vector<16x16x128xi1>
    %49 = vector.broadcast %cst_15 : f32 to vector<16x16x128xf32>
    %50 = arith.select %48, %42, %49 : vector<16x16x128xi1>, vector<16x16x128xf32>
    %51 = arith.maximumf %46, %50 : vector<16x16x128xf32>
    %52 = arith.maximumf %40, %51 : vector<16x16x128xf32>
    %c0_16 = arith.constant 0 : index
    %c1 = arith.constant 1 : index
    %c0_17 = arith.constant 0 : index
    %c0_18 = arith.constant 0 : index
    %c0_19 = arith.constant 0 : index
    %53 = vector.load %arg3[%c0_16, %c1, %c0_17, %c0_18, %c0_19] : memref<1x4x16x16x128xf32, #tpu.memory_space<vmem>>, vector<1x1x16x16x128xf32>
    %54 = vector.shape_cast %53 : vector<1x1x16x16x128xf32> to vector<16x16x128xf32>
    %55 = vector.shape_cast %52 : vector<16x16x128xf32> to vector<1x1x16x16x128xf32>
    tpu.vector_store %arg3[%c0_16, %c1, %c0_17, %c0_18, %c0_19], %55 {strides = array<i32>} : memref<1x4x16x16x128xf32, #tpu.memory_space<vmem>>, vector<1x1x16x16x128xf32>,
    %56 = vector.extract_strided_slice %52 {offsets = [1, 0, 0], sizes = [15, 16, 128], strides = [1, 1, 1]} : vector<16x16x128xf32> to vector<15x16x128xf32>
    %57 = vector.extract_strided_slice %0 {offsets = [0, 0, 0], sizes = [1, 16, 128], strides = [1, 1, 1]} : vector<2x16x128xf32> to vector<1x16x128xf32>
    %58 = tpu.concatenate %56, %57 in 0 : vector<15x16x128xf32>, vector<1x16x128xf32> -> vector<16x16x128xf32>
    %59 = vector.extract_strided_slice %0 {offsets = [0, 0, 0], sizes = [1, 16, 128], strides = [1, 1, 1]} : vector<2x16x128xf32> to vector<1x16x128xf32>
    %60 = vector.extract_strided_slice %52 {offsets = [0, 0, 0], sizes = [15, 16, 128], strides = [1, 1, 1]} : vector<16x16x128xf32> to vector<15x16x128xf32>
    %61 = tpu.concatenate %59, %60 in 0 : vector<1x16x128xf32>, vector<15x16x128xf32> -> vector<16x16x128xf32>
    %62 = arith.maximumf %58, %61 : vector<16x16x128xf32>
    %63 = arith.maximumf %52, %62 : vector<16x16x128xf32>
    %64 = vector.extract_strided_slice %52 {offsets = [2, 0, 0], sizes = [14, 16, 128], strides = [1, 1, 1]} : vector<16x16x128xf32> to vector<14x16x128xf32>
    %65 = tpu.concatenate %64, %0 in 0 : vector<14x16x128xf32>, vector<2x16x128xf32> -> vector<16x16x128xf32>
    %66 = vector.extract_strided_slice %52 {offsets = [0, 0, 0], sizes = [14, 16, 128], strides = [1, 1, 1]} : vector<16x16x128xf32> to vector<14x16x128xf32>
    %67 = tpu.concatenate %0, %66 in 0 : vector<2x16x128xf32>, vector<14x16x128xf32> -> vector<16x16x128xf32>
    %68 = arith.maximumf %65, %67 : vector<16x16x128xf32>
    %69 = arith.maximumf %63, %68 : vector<16x16x128xf32>
    %c15_i32_20 = arith.constant 15 : i32
    %70 = tpu.dynamic_rotate %69 by %c15_i32_20 dim 1 : vector<16x16x128xf32>, i32 -> vector<16x16x128xf32>
    %c1_i32_21 = arith.constant 1 : i32
    %71 = tpu.dynamic_rotate %69 by %c1_i32_21 dim 1 : vector<16x16x128xf32>, i32 -> vector<16x16x128xf32>
    %cst_22 = arith.constant 0xFF800000 : f32
    %72 = vector.shape_cast %3 : vector<16x128xi1> to vector<1x16x128xi1>
    %73 = vector.broadcast %72 : vector<1x16x128xi1> to vector<16x16x128xi1>
    %74 = vector.broadcast %cst_22 : f32 to vector<16x16x128xf32>
    %75 = arith.select %73, %70, %74 : vector<16x16x128xi1>, vector<16x16x128xf32>
    %cst_23 = arith.constant 0xFF800000 : f32
    %76 = vector.shape_cast %7 : vector<16x128xi1> to vector<1x16x128xi1>
    %77 = vector.broadcast %76 : vector<1x16x128xi1> to vector<16x16x128xi1>
    %78 = vector.broadcast %cst_23 : f32 to vector<16x16x128xf32>
    %79 = arith.select %77, %71, %78 : vector<16x16x128xi1>, vector<16x16x128xf32>
    %80 = arith.maximumf %75, %79 : vector<16x16x128xf32>
    %81 = arith.maximumf %69, %80 : vector<16x16x128xf32>
    %c14_i32_24 = arith.constant 14 : i32
    %82 = tpu.dynamic_rotate %69 by %c14_i32_24 dim 1 : vector<16x16x128xf32>, i32 -> vector<16x16x128xf32>
    %c2_i32_25 = arith.constant 2 : i32
    %83 = tpu.dynamic_rotate %69 by %c2_i32_25 dim 1 : vector<16x16x128xf32>, i32 -> vector<16x16x128xf32>
    %cst_26 = arith.constant 0xFF800000 : f32
    %84 = vector.shape_cast %5 : vector<16x128xi1> to vector<1x16x128xi1>
    %85 = vector.broadcast %84 : vector<1x16x128xi1> to vector<16x16x128xi1>
    %86 = vector.broadcast %cst_26 : f32 to vector<16x16x128xf32>
    %87 = arith.select %85, %82, %86 : vector<16x16x128xi1>, vector<16x16x128xf32>
    %cst_27 = arith.constant 0xFF800000 : f32
    %88 = vector.shape_cast %9 : vector<16x128xi1> to vector<1x16x128xi1>
    %89 = vector.broadcast %88 : vector<1x16x128xi1> to vector<16x16x128xi1>
    %90 = vector.broadcast %cst_27 : f32 to vector<16x16x128xf32>
    %91 = arith.select %89, %83, %90 : vector<16x16x128xi1>, vector<16x16x128xf32>
    %92 = arith.maximumf %87, %91 : vector<16x16x128xf32>
    %93 = arith.maximumf %81, %92 : vector<16x16x128xf32>
    %c0_28 = arith.constant 0 : index
    %c2 = arith.constant 2 : index
    %c0_29 = arith.constant 0 : index
    %c0_30 = arith.constant 0 : index
    %c0_31 = arith.constant 0 : index
    %94 = vector.load %arg3[%c0_28, %c2, %c0_29, %c0_30, %c0_31] : memref<1x4x16x16x128xf32, #tpu.memory_space<vmem>>, vector<1x1x16x16x128xf32>
    %95 = vector.shape_cast %94 : vector<1x1x16x16x128xf32> to vector<16x16x128xf32>
    %96 = vector.shape_cast %93 : vector<16x16x128xf32> to vector<1x1x16x16x128xf32>
    tpu.vector_store %arg3[%c0_28, %c2, %c0_29, %c0_30, %c0_31], %96 {strides = array<i32>} : memref<1x4x16x16x128xf32, #tpu.memory_space<vmem>>, vector<1x1x16x16x128xf32>,
    %97 = vector.extract_strided_slice %93 {offsets = [1, 0, 0], sizes = [15, 16, 128], strides = [1, 1, 1]} : vector<16x16x128xf32> to vector<15x16x128xf32>
    %98 = vector.extract_strided_slice %0 {offsets = [0, 0, 0], sizes = [1, 16, 128], strides = [1, 1, 1]} : vector<2x16x128xf32> to vector<1x16x128xf32>
    %99 = tpu.concatenate %97, %98 in 0 : vector<15x16x128xf32>, vector<1x16x128xf32> -> vector<16x16x128xf32>
    %100 = vector.extract_strided_slice %0 {offsets = [0, 0, 0], sizes = [1, 16, 128], strides = [1, 1, 1]} : vector<2x16x128xf32> to vector<1x16x128xf32>
    %101 = vector.extract_strided_slice %93 {offsets = [0, 0, 0], sizes = [15, 16, 128], strides = [1, 1, 1]} : vector<16x16x128xf32> to vector<15x16x128xf32>
    %102 = tpu.concatenate %100, %101 in 0 : vector<1x16x128xf32>, vector<15x16x128xf32> -> vector<16x16x128xf32>
    %103 = arith.maximumf %99, %102 : vector<16x16x128xf32>
    %104 = arith.maximumf %93, %103 : vector<16x16x128xf32>
    %105 = vector.extract_strided_slice %93 {offsets = [2, 0, 0], sizes = [14, 16, 128], strides = [1, 1, 1]} : vector<16x16x128xf32> to vector<14x16x128xf32>
    %106 = tpu.concatenate %105, %0 in 0 : vector<14x16x128xf32>, vector<2x16x128xf32> -> vector<16x16x128xf32>
    %107 = vector.extract_strided_slice %93 {offsets = [0, 0, 0], sizes = [14, 16, 128], strides = [1, 1, 1]} : vector<16x16x128xf32> to vector<14x16x128xf32>
    %108 = tpu.concatenate %0, %107 in 0 : vector<2x16x128xf32>, vector<14x16x128xf32> -> vector<16x16x128xf32>
    %109 = arith.maximumf %106, %108 : vector<16x16x128xf32>
    %110 = arith.maximumf %104, %109 : vector<16x16x128xf32>
    %c15_i32_32 = arith.constant 15 : i32
    %111 = tpu.dynamic_rotate %110 by %c15_i32_32 dim 1 : vector<16x16x128xf32>, i32 -> vector<16x16x128xf32>
    %c1_i32_33 = arith.constant 1 : i32
    %112 = tpu.dynamic_rotate %110 by %c1_i32_33 dim 1 : vector<16x16x128xf32>, i32 -> vector<16x16x128xf32>
    %cst_34 = arith.constant 0xFF800000 : f32
    %113 = vector.shape_cast %3 : vector<16x128xi1> to vector<1x16x128xi1>
    %114 = vector.broadcast %113 : vector<1x16x128xi1> to vector<16x16x128xi1>
    %115 = vector.broadcast %cst_34 : f32 to vector<16x16x128xf32>
    %116 = arith.select %114, %111, %115 : vector<16x16x128xi1>, vector<16x16x128xf32>
    %cst_35 = arith.constant 0xFF800000 : f32
    %117 = vector.shape_cast %7 : vector<16x128xi1> to vector<1x16x128xi1>
    %118 = vector.broadcast %117 : vector<1x16x128xi1> to vector<16x16x128xi1>
    %119 = vector.broadcast %cst_35 : f32 to vector<16x16x128xf32>
    %120 = arith.select %118, %112, %119 : vector<16x16x128xi1>, vector<16x16x128xf32>
    %121 = arith.maximumf %116, %120 : vector<16x16x128xf32>
    %122 = arith.maximumf %110, %121 : vector<16x16x128xf32>
    %c14_i32_36 = arith.constant 14 : i32
    %123 = tpu.dynamic_rotate %110 by %c14_i32_36 dim 1 : vector<16x16x128xf32>, i32 -> vector<16x16x128xf32>
    %c2_i32_37 = arith.constant 2 : i32
    %124 = tpu.dynamic_rotate %110 by %c2_i32_37 dim 1 : vector<16x16x128xf32>, i32 -> vector<16x16x128xf32>
    %cst_38 = arith.constant 0xFF800000 : f32
    %125 = vector.shape_cast %5 : vector<16x128xi1> to vector<1x16x128xi1>
    %126 = vector.broadcast %125 : vector<1x16x128xi1> to vector<16x16x128xi1>
    %127 = vector.broadcast %cst_38 : f32 to vector<16x16x128xf32>
    %128 = arith.select %126, %123, %127 : vector<16x16x128xi1>, vector<16x16x128xf32>
    %cst_39 = arith.constant 0xFF800000 : f32
    %129 = vector.shape_cast %9 : vector<16x128xi1> to vector<1x16x128xi1>
    %130 = vector.broadcast %129 : vector<1x16x128xi1> to vector<16x16x128xi1>
    %131 = vector.broadcast %cst_39 : f32 to vector<16x16x128xf32>
    %132 = arith.select %130, %124, %131 : vector<16x16x128xi1>, vector<16x16x128xf32>
    %133 = arith.maximumf %128, %132 : vector<16x16x128xf32>
    %134 = arith.maximumf %122, %133 : vector<16x16x128xf32>
    %c0_40 = arith.constant 0 : index
    %c3 = arith.constant 3 : index
    %c0_41 = arith.constant 0 : index
    %c0_42 = arith.constant 0 : index
    %c0_43 = arith.constant 0 : index
    %135 = vector.load %arg3[%c0_40, %c3, %c0_41, %c0_42, %c0_43] : memref<1x4x16x16x128xf32, #tpu.memory_space<vmem>>, vector<1x1x16x16x128xf32>
    %136 = vector.shape_cast %135 : vector<1x1x16x16x128xf32> to vector<16x16x128xf32>
    %137 = vector.shape_cast %134 : vector<16x16x128xf32> to vector<1x1x16x16x128xf32>
    tpu.vector_store %arg3[%c0_40, %c3, %c0_41, %c0_42, %c0_43], %137 {strides = array<i32>} : memref<1x4x16x16x128xf32, #tpu.memory_space<vmem>>, vector<1x1x16x16x128xf32>,
    return
  }
  func.func @transform_0(%arg0: i32, %arg1: i32) -> (i32, i32, i32, i32) {
    %c0_i32 = arith.constant 0 : i32
    %c0_i32_0 = arith.constant 0 : i32
    %c0_i32_1 = arith.constant 0 : i32
    return %arg0, %c0_i32, %c0_i32_0, %arg1 : i32, i32, i32, i32
  }
  func.func @transform_1(%arg0: i32, %arg1: i32) -> (i32, i32, i32, i32, i32) {
    %c0_i32 = arith.constant 0 : i32
    %c0_i32_0 = arith.constant 0 : i32
    %c0_i32_1 = arith.constant 0 : i32
    %c0_i32_2 = arith.constant 0 : i32
    return %arg0, %c0_i32, %c0_i32_0, %c0_i32_1, %arg1 : i32, i32, i32, i32, i32
  }
}

</mosaic_0001>

<llo_original>
// kernel: tpu_custom_call.1
$region0: #{tpu_custom_call.1}
  #allocation0 [shape = 'u32[]', space=smem, size = 0x4, offset = 0x4, fixed_abs, tag = 'smem constant byte address 0x4 - core index']
  #allocation1 [shape = 'u32[144,128]{1,0:T(1,128)}', space=vmem, size = 0x12000, scoped, tag = 'internal scratch']
  %s0 = inlined_call_operand.hbm [shape: f32[2,16,16,128], index: 0, kind: input, shape index: {}]
  %s1 = inlined_call_operand.hbm [shape: f32[2,4,16,16,128], index: 1, kind: output, shape index: {}]
  %s2 = sld [smem:[#allocation0]]
  $region41: #{tpu_custom_call.1} parent=0
    _
  %s4 = ssub.s32 1, %s2
  %s5 = scalar_select 0, %s4, %s2
  $region1: #{tpu_custom_call.1} parent=0
    #allocation2 [shape = 'u8[262144]{0}', space=vmem, size = 0x40000, scoped, tag = 'input window, operand 0']
    #allocation3 [shape = 's32[2]{0}', space=sflag, size = 0x8, scoped, tag = 'scoped memory for tpu_custom_call.1']
    #allocation4 [shape = 's32[2]{0}', space=sflag, size = 0x8, scoped, tag = 'scoped memory for tpu_custom_call.1']
    #allocation5 [shape = 'u8[1048576]{0}', space=vmem, size = 0x100000, scoped, tag = 'output window, operand 0']
    %6 = vsyncpa [#allocation3], 0
    %s7 = scalar_lea.sflag [#allocation3], 1
    %8 = vsyncpa %s7, 0
    %9 = vsyncpa [#allocation4], 0
    %s10 = scalar_lea.sflag [#allocation4], 1
    %11 = vsyncpa %s10, 0
    loop: start=0, step=1, limit=4
    $region2: #{tpu_custom_call.1} parent=1 // loop_pre_header
      _
    $region3: #{tpu_custom_call.1} parent=1 // loop_header
      %s13 = sphi 0, %s17
      %p14 = scmp.ge.s32.totalorder %s13, 4
      %s20 = sphi 0, %s32
      %s21 = sphi 0, %s28
      %s22 = sphi 0, %s20
      %s23 = sphi 0, %s21
      %s24 = sphi 0, %s22
      %s25 = sphi 0, %s23
      %s37 = sphi 0, %s39
      %s40 = sphi 0, %s37
      %s41 = sphi 0, %s40
      %s57 = sphi 0, %s41
      %s65 = sphi 0, %s67
      %s68 = sphi 0, %s65
      %s69 = sphi 0, %s68
      %s85 = sphi 0, %s69
    $region4: #{tpu_custom_call.1} parent=1 // loop_header_branch
      %16 = sbr.rel (%p14) target = $region8
    $region5: #{tpu_custom_call.1} parent=1 // loop_body
      %s18 = ssub.s32 %s13, 1
      %s19 = ssub.s32 %s13, 2
      %s26 = sadd.s32 1, %s21
      %p27 = scmp.ge.s32.totalorder %s26, 1
      %s28 = scalar_select %p27, 0, %s26
      %s29 = sadd.s32 1, %s20
      %s30 = scalar_select %p27, %s29, %s20
      %p31 = scmp.ge.s32.totalorder %s30, 2
      %s32 = scalar_select %p31, 0, %s30
      %s33 = ssub.s32 %s20, %s32
      %s34 = ssub.s32 %s21, %s28
      %s35 = sor.u32 %s33, %s34
      %p36 = scmp.eq.s32.totalorder %s35, 0
      %s38 = sadd.s32 %s37, 1
      %s39 = scalar_select %p36, %s37, %s38
      %p42 = pneg %p36
      %p43 = scmp.eq.s32.totalorder %s13, 1
      %p44 = por %p42, %p43
      %p45 = scmp.ne.s32.totalorder %s37, %s40
      %p46 = scmp.eq.s32.totalorder %s13, 0
      %p47 = por %p45, %p46
      %p48 = scmp.ne.s32.totalorder %s37, %s40
      %p49 = scmp.eq.s32.totalorder %s18, 1
      %p50 = por %p48, %p49
      %p51 = scmp.ne.s32.totalorder %s40, %s41
      %p52 = scmp.eq.s32.totalorder %s18, 0
      %p53 = por %p51, %p52
      %p54 = scmp.ne.s32.totalorder %s40, %s41
      %p55 = scmp.eq.s32.totalorder %s19, 1
      %p56 = por %p54, %p55
      %p58 = scmp.ne.s32.totalorder %s41, %s57
      %p59 = scmp.eq.s32.totalorder %s19, 0
      %p60 = por %p58, %p59
      %s61 = ssub.s32 %s20, %s32
      %s62 = ssub.s32 %s21, %s28
      %s63 = sor.u32 %s61, %s62
      %p64 = scmp.eq.s32.totalorder %s63, 0
      %s66 = sadd.s32 %s65, 1
      %s67 = scalar_select %p64, %s65, %s66
      %p70 = pneg %p64
      %p71 = scmp.eq.s32.totalorder %s13, 1
      %p72 = por %p70, %p71
      %p73 = scmp.ne.s32.totalorder %s65, %s68
      %p74 = scmp.eq.s32.totalorder %s13, 0
      %p75 = por %p73, %p74
      %p76 = scmp.ne.s32.totalorder %s65, %s68
      %p77 = scmp.eq.s32.totalorder %s18, 1
      %p78 = por %p76, %p77
      %p79 = scmp.ne.s32.totalorder %s68, %s69
      %p80 = scmp.eq.s32.totalorder %s18, 0
      %p81 = por %p79, %p80
      %p82 = scmp.ne.s32.totalorder %s68, %s69
      %p83 = scmp.eq.s32.totalorder %s19, 1
      %p84 = por %p82, %p83
      %p86 = scmp.ne.s32.totalorder %s69, %s85
      %p87 = scmp.eq.s32.totalorder %s19, 0
      %p88 = por %p86, %p87
      %p89 = scmp.le.s32.totalorder 1, %s13
      %p90 = scmp.lt.s32.totalorder %s13, 3
      %p91 = pnand %p89, %p90
      %p92 = pneg %p91
      // Predicated region
      $region9: #{tpu_custom_call.1} parent=5 // pred_check
        _
      $region10: #{tpu_custom_call.1} parent=5 // pred_check_branch
        %94 = sbr.rel (%p91) target = $region12
      $region11: #{tpu_custom_call.1} parent=5 // pred_region
        %s95 = ssub.s32 %s13, 1
      $region12: #{tpu_custom_call.1} parent=5 // pred_fallthru
        _
      %p96 = scmp.lt.s32.totalorder %s13, 2
      // Predicated region
      $region13: #{tpu_custom_call.1} parent=5 // pred_check
        %p97 = pneg %p96
      $region14: #{tpu_custom_call.1} parent=5 // pred_check_branch
        %99 = sbr.rel (%p97) target = $region16
      $region15: #{tpu_custom_call.1} parent=5 // pred_region
        // Predicated region
        $region17: #{tpu_custom_call.1} parent=15 // pred_check
          %p100 = pneg %p47
        $region18: #{tpu_custom_call.1} parent=15 // pred_check_branch
          %102 = sbr.rel (%p100) target = $region20
        $region19: #{tpu_custom_call.1} parent=15 // pred_region
          %s103 = sand.u32 %s37, 1
          %s104 = scalar_lea.sflag [#allocation3], %s103
          %s105 = sand.u32 %s37, 1
          %s106 = smul.addr %s105, 256
          %s107 = scalar_lea.vmem [#allocation2], %s106
          %s109 = ssub.s32 4096, 4096
          %110 = vsyncadd %s104, %s109
          %s111 = smul.addr %s20, 32
          %s112 = sadd.s32 %s21, %s111
          %s113 = smul.addr %s112, 128
          %s114 = scalar_lea.hbm %s0, %s113
          %s115 = sshll.u32 %s107, 4
          %s116 = int_to_ptr.vmem [resolvable:$true] %s115
          %121 = dma.hbm_to_vmem [thread:$0]  %s114, 4096, %s116, %s104, 128, 128, 8
        $region20: #{tpu_custom_call.1} parent=15 // pred_fallthru
          _
      $region16: #{tpu_custom_call.1} parent=5 // pred_fallthru
        _
      %p122 = scmp.le.s32.totalorder 1, %s13
      %p123 = scmp.lt.s32.totalorder %s13, 3
      %p124 = pnand %p122, %p123
      %p125 = pneg %p124
      // Predicated region
      $region21: #{tpu_custom_call.1} parent=5 // pred_check
        _
      $region22: #{tpu_custom_call.1} parent=5 // pred_check_branch
        %127 = sbr.rel (%p124) target = $region24
      $region23: #{tpu_custom_call.1} parent=5 // pred_region
        %s128 = ssub.s32 %s13, 1
        %s129 = sand.u32 %s40, 1
        %s130 = scalar_lea.sflag [#allocation3], %s129
        %s131 = sand.u32 %s40, 1
        %s132 = smul.addr %s131, 256
        %s133 = scalar_lea.vmem [#allocation2], %s132
        // Predicated region
        $region25: #{tpu_custom_call.1} parent=23 // pred_check
          %p134 = pneg %p53
        $region26: #{tpu_custom_call.1} parent=23 // pred_check_branch
          %136 = sbr.rel (%p134) target = $region28
        $region27: #{tpu_custom_call.1} parent=23 // pred_region
          %137 = dma.done %s130, 4096
        $region28: #{tpu_custom_call.1} parent=23 // pred_fallthru
          _
        %s138 = sand.u32 %s40, 1
        %s139 = scalar_lea.sflag [#allocation3], %s138
        %s140 = sand.u32 %s40, 1
        %s141 = smul.addr %s140, 256
        %s142 = scalar_lea.vmem [#allocation2], %s141
        %p143 = pneg %p53
        %p144 = pneg %p50
        %p145 = pneg %p81
        %p146 = pneg %p78
        %s147 = sand.u32 %s68, 1
        %s148 = scalar_lea.sflag [#allocation4], %s147
        %s149 = sand.u32 %s68, 1
        %s150 = smul.addr %s149, 1024
        %s151 = scalar_lea.vmem [#allocation5], %s150
        %v152 = vlaneseq
        %v153 = vshrl.u32 %v152, 7
        %v154 = vadd.s32 %v153, 8
        %vm155 = vcmp.lt.s32.totalorder %v153, 15
        %vm156 = vcmp.lt.s32.totalorder %v154, 15
        %vm157 = vcmp.lt.s32.totalorder %v153, 14
        %vm158 = vcmp.lt.s32.totalorder %v154, 14
        %vm159 = vcmp.ge.s32.totalorder %v153, 1
        %vm160 = vcmp.ge.s32.totalorder %v154, 1
        %vm161 = vcmp.ge.s32.totalorder %v153, 2
        %vm162 = vcmp.ge.s32.totalorder %v154, 2
        %v163 = vld [vmem:[%s133] sm:$0xff]
        %v164 = vld [vmem:[%s133 + $0x8] sm:$0xff]
        %v165 = vld [vmem:[%s133 + $0x10] sm:$0xff]
        %v166 = vld [vmem:[%s133 + $0x18] sm:$0xff]
        %v167 = vld [vmem:[%s133 + $0x20] sm:$0xff]
        %v168 = vld [vmem:[%s133 + $0x28] sm:$0xff]
        %v169 = vld [vmem:[%s133 + $0x30] sm:$0xff]
        %v170 = vld [vmem:[%s133 + $0x38] sm:$0xff]
        %v171 = vld [vmem:[%s133 + $0x40] sm:$0xff]
        %v172 = vld [vmem:[%s133 + $0x48] sm:$0xff]
        %v173 = vld [vmem:[%s133 + $0x50] sm:$0xff]
        %v174 = vld [vmem:[%s133 + $0x58] sm:$0xff]
        %v175 = vld [vmem:[%s133 + $0x60] sm:$0xff]
        %v176 = vld [vmem:[%s133 + $0x68] sm:$0xff]
        %v177 = vld [vmem:[%s133 + $0x70] sm:$0xff]
        %v178 = vld [vmem:[%s133 + $0x78] sm:$0xff]
        %v179 = vld [vmem:[%s133 + $0x80] sm:$0xff]
        %v180 = vld [vmem:[%s133 + $0x88] sm:$0xff]
        %v181 = vld [vmem:[%s133 + $0x90] sm:$0xff]
        %v182 = vld [vmem:[%s133 + $0x98] sm:$0xff]
        %v183 = vld [vmem:[%s133 + $0xa0] sm:$0xff]
        %v184 = vld [vmem:[%s133 + $0xa8] sm:$0xff]
        %v185 = vld [vmem:[%s133 + $0xb0] sm:$0xff]
        %v186 = vld [vmem:[%s133 + $0xb8] sm:$0xff]
        %v187 = vld [vmem:[%s133 + $0xc0] sm:$0xff]
        %v188 = vld [vmem:[%s133 + $0xc8] sm:$0xff]
        %v189 = vld [vmem:[%s133 + $0xd0] sm:$0xff]
        %v190 = vld [vmem:[%s133 + $0xd8] sm:$0xff]
        %v191 = vld [vmem:[%s133 + $0xe0] sm:$0xff]
        %v192 = vld [vmem:[%s133 + $0xe8] sm:$0xff]
        %v193 = vld [vmem:[%s133 + $0xf0] sm:$0xff]
        %v194 = vld [vmem:[%s133 + $0xf8] sm:$0xff]
        %195 = vst [vmem:[%s151] sm:$0xff] %v163
        %196 = vst [vmem:[%s151 + $0x8] sm:$0xff] %v164
        %197 = vst [vmem:[%s151 + $0x10] sm:$0xff] %v165
        %198 = vst [vmem:[%s151 + $0x18] sm:$0xff] %v166
        %199 = vst [vmem:[%s151 + $0x20] sm:$0xff] %v167
        %200 = vst [vmem:[%s151 + $0x28] sm:$0xff] %v168
        %201 = vst [vmem:[%s151 + $0x30] sm:$0xff] %v169
        %202 = vst [vmem:[%s151 + $0x38] sm:$0xff] %v170
        %203 = vst [vmem:[%s151 + $0x40] sm:$0xff] %v171
        %204 = vst [vmem:[%s151 + $0x48] sm:$0xff] %v172
        %205 = vst [vmem:[%s151 + $0x50] sm:$0xff] %v173
        %206 = vst [vmem:[%s151 + $0x58] sm:$0xff] %v174
        %207 = vst [vmem:[%s151 + $0x60] sm:$0xff] %v175
        %208 = vst [vmem:[%s151 + $0x68] sm:$0xff] %v176
        %209 = vst [vmem:[%s151 + $0x70] sm:$0xff] %v177
        %210 = vst [vmem:[%s151 + $0x78] sm:$0xff] %v178
        %211 = vst [vmem:[%s151 + $0x80] sm:$0xff] %v179
        %212 = vst [vmem:[%s151 + $0x88] sm:$0xff] %v180
        %213 = vst [vmem:[%s151 + $0x90] sm:$0xff] %v181
        %214 = vst [vmem:[%s151 + $0x98] sm:$0xff] %v182
        %215 = vst [vmem:[%s151 + $0xa0] sm:$0xff] %v183
        %216 = vst [vmem:[%s151 + $0xa8] sm:$0xff] %v184
        %217 = vst [vmem:[%s151 + $0xb0] sm:$0xff] %v185
        %218 = vst [vmem:[%s151 + $0xb8] sm:$0xff] %v186
        %219 = vst [vmem:[%s151 + $0xc0] sm:$0xff] %v187
        %220 = vst [vmem:[%s151 + $0xc8] sm:$0xff] %v188
        %221 = vst [vmem:[%s151 + $0xd0] sm:$0xff] %v189
        %222 = vst [vmem:[%s151 + $0xd8] sm:$0xff] %v190
        %223 = vst [vmem:[%s151 + $0xe0] sm:$0xff] %v191
        %224 = vst [vmem:[%s151 + $0xe8] sm:$0xff] %v192
        %225 = vst [vmem:[%s151 + $0xf0] sm:$0xff] %v193
        %226 = vst [vmem:[%s151 + $0xf8] sm:$0xff] %v194
        %v227 = vmax.f32 %v167, %v163
        %v228 = vmax.f32 %v168, %v164
        %v229 = vmax.f32 %v169, %v165
        %v230 = vmax.f32 %v170, %v166
        %v231 = vmax.f32 %v171, %v167
        %v232 = vmax.f32 %v172, %v168
        %v233 = vmax.f32 %v173, %v169
        %v234 = vmax.f32 %v174, %v170
        %v235 = vmax.f32 %v175, %v171
        %v236 = vmax.f32 %v176, %v172
        %v237 = vmax.f32 %v177, %v173
        %v238 = vmax.f32 %v178, %v174
        %v239 = vmax.f32 %v179, %v175
        %v240 = vmax.f32 %v180, %v176
        %v241 = vmax.f32 %v181, %v177
        %v242 = vmax.f32 %v182, %v178
        %v243 = vmax.f32 %v183, %v179
        %v244 = vmax.f32 %v184, %v180
        %v245 = vmax.f32 %v185, %v181
        %v246 = vmax.f32 %v186, %v182
        %v247 = vmax.f32 %v187, %v183
        %v248 = vmax.f32 %v188, %v184
        %v249 = vmax.f32 %v189, %v185
        %v250 = vmax.f32 %v190, %v186
        %v251 = vmax.f32 %v191, %v187
        %v252 = vmax.f32 %v192, %v188
        %v253 = vmax.f32 %v193, %v189
        %v254 = vmax.f32 %v194, %v190
        %v255 = vmax.f32 %v163, %v165
        %v256 = vmax.f32 %v164, %v166
        %v257 = vmax.f32 %v165, %v227
        %v258 = vmax.f32 %v166, %v228
        %v259 = vmax.f32 %v167, %v229
        %v260 = vmax.f32 %v168, %v230
        %v261 = vmax.f32 %v169, %v231
        %v262 = vmax.f32 %v170, %v232
        %v263 = vmax.f32 %v171, %v233
        %v264 = vmax.f32 %v172, %v234
        %v265 = vmax.f32 %v173, %v235
        %v266 = vmax.f32 %v174, %v236
        %v267 = vmax.f32 %v175, %v237
        %v268 = vmax.f32 %v176, %v238
        %v269 = vmax.f32 %v177, %v239
        %v270 = vmax.f32 %v178, %v240
        %v271 = vmax.f32 %v179, %v241
        %v272 = vmax.f32 %v180, %v242
        %v273 = vmax.f32 %v181, %v243
        %v274 = vmax.f32 %v182, %v244
        %v275 = vmax.f32 %v183, %v245
        %v276 = vmax.f32 %v184, %v246
        %v277 = vmax.f32 %v185, %v247
        %v278 = vmax.f32 %v186, %v248
        %v279 = vmax.f32 %v187, %v249
        %v280 = vmax.f32 %v188, %v250
        %v281 = vmax.f32 %v189, %v251
        %v282 = vmax.f32 %v190, %v252
        %v283 = vmax.f32 %v191, %v253
        %v284 = vmax.f32 %v192, %v254
        %v285 = vmax.f32 %v193, %v191
        %v286 = vmax.f32 %v194, %v192
        %v287 = vmax.f32 %v171, %v163
        %v288 = vmax.f32 %v172, %v164
        %v289 = vmax.f32 %v173, %v165
        %v290 = vmax.f32 %v174, %v166
        %v291 = vmax.f32 %v175, %v167
        %v292 = vmax.f32 %v176, %v168
        %v293 = vmax.f32 %v177, %v169
        %v294 = vmax.f32 %v178, %v170
        %v295 = vmax.f32 %v179, %v171
        %v296 = vmax.f32 %v180, %v172
        %v297 = vmax.f32 %v181, %v173
        %v298 = vmax.f32 %v182, %v174
        %v299 = vmax.f32 %v183, %v175
        %v300 = vmax.f32 %v184, %v176
        %v301 = vmax.f32 %v185, %v177
        %v302 = vmax.f32 %v186, %v178
        %v303 = vmax.f32 %v187, %v179
        %v304 = vmax.f32 %v188, %v180
        %v305 = vmax.f32 %v189, %v181
        %v306 = vmax.f32 %v190, %v182
        %v307 = vmax.f32 %v191, %v183
        %v308 = vmax.f32 %v192, %v184
        %v309 = vmax.f32 %v193, %v185
        %v310 = vmax.f32 %v194, %v186
        %v311 = vmax.f32 %v255, %v167
        %v312 = vmax.f32 %v256, %v168
        %v313 = vmax.f32 %v257, %v169
        %v314 = vmax.f32 %v258, %v170
        %v315 = vmax.f32 %v259, %v287
        %v316 = vmax.f32 %v260, %v288
        %v317 = vmax.f32 %v261, %v289
        %v318 = vmax.f32 %v262, %v290
        %v319 = vmax.f32 %v263, %v291
        %v320 = vmax.f32 %v264, %v292
        %v321 = vmax.f32 %v265, %v293
        %v322 = vmax.f32 %v266, %v294
        %v323 = vmax.f32 %v267, %v295
        %v324 = vmax.f32 %v268, %v296
        %v325 = vmax.f32 %v269, %v297
        %v326 = vmax.f32 %v270, %v298
        %v327 = vmax.f32 %v271, %v299
        %v328 = vmax.f32 %v272, %v300
        %v329 = vmax.f32 %v273, %v301
        %v330 = vmax.f32 %v274, %v302
        %v331 = vmax.f32 %v275, %v303
        %v332 = vmax.f32 %v276, %v304
        %v333 = vmax.f32 %v277, %v305
        %v334 = vmax.f32 %v278, %v306
        %v335 = vmax.f32 %v279, %v307
        %v336 = vmax.f32 %v280, %v308
        %v337 = vmax.f32 %v281, %v309
        %v338 = vmax.f32 %v282, %v310
        %v339 = vmax.f32 %v283, %v187
        %v340 = vmax.f32 %v284, %v188
        %v341 = vmax.f32 %v285, %v189
        %v342 = vmax.f32 %v286, %v190
        %v343 = vrot.slane %v311, 1
        %v344 = vrot.slane %v313, 1
        %v345 = vrot.slane %v315, 1
        %v346 = vrot.slane %v317, 1
        %v347 = vrot.slane %v319, 1
        %v348 = vrot.slane %v321, 1
        %v349 = vrot.slane %v323, 1
        %v350 = vrot.slane %v325, 1
        %v351 = vrot.slane %v327, 1
        %v352 = vrot.slane %v329, 1
        %v353 = vrot.slane %v331, 1
        %v354 = vrot.slane %v333, 1
        %v355 = vrot.slane %v335, 1
        %v356 = vrot.slane %v337, 1
        %v357 = vrot.slane %v339, 1
        %v358 = vrot.slane %v341, 1
        %v359 = vrot.slane %v312, 1
        %v360 = vrot.slane %v314, 1
        %v361 = vrot.slane %v316, 1
        %v362 = vrot.slane %v318, 1
        %v363 = vrot.slane %v320, 1
        %v364 = vrot.slane %v322, 1
        %v365 = vrot.slane %v324, 1
        %v366 = vrot.slane %v326, 1
        %v367 = vrot.slane %v328, 1
        %v368 = vrot.slane %v330, 1
        %v369 = vrot.slane %v332, 1
        %v370 = vrot.slane %v334, 1
        %v371 = vrot.slane %v336, 1
        %v372 = vrot.slane %v338, 1
        %v373 = vrot.slane %v340, 1
        %v374 = vrot.slane %v342, 1
        %vm375 = vcmp.lt.s32.totalorder %v153, 7
        %v376 = vsel %vm375, %v343, %v359
        %v377 = vsel %vm375, %v344, %v360
        %v378 = vsel %vm375, %v345, %v361
        %v379 = vsel %vm375, %v346, %v362
        %v380 = vsel %vm375, %v347, %v363
        %v381 = vsel %vm375, %v348, %v364
        %v382 = vsel %vm375, %v349, %v365
        %v383 = vsel %vm375, %v350, %v366
        %v384 = vsel %vm375, %v351, %v367
        %v385 = vsel %vm375, %v352, %v368
        %v386 = vsel %vm375, %v353, %v369
        %v387 = vsel %vm375, %v354, %v370
        %v388 = vsel %vm375, %v355, %v371
        %v389 = vsel %vm375, %v356, %v372
        %v390 = vsel %vm375, %v357, %v373
        %v391 = vsel %vm375, %v358, %v374
        %v392 = vsel %vm375, %v359, %v343
        %v393 = vsel %vm375, %v360, %v344
        %v394 = vsel %vm375, %v361, %v345
        %v395 = vsel %vm375, %v362, %v346
        %v396 = vsel %vm375, %v363, %v347
        %v397 = vsel %vm375, %v364, %v348
        %v398 = vsel %vm375, %v365, %v349
        %v399 = vsel %vm375, %v366, %v350
        %v400 = vsel %vm375, %v367, %v351
        %v401 = vsel %vm375, %v368, %v352
        %v402 = vsel %vm375, %v369, %v353
        %v403 = vsel %vm375, %v370, %v354
        %v404 = vsel %vm375, %v371, %v355
        %v405 = vsel %vm375, %v372, %v356
        %v406 = vsel %vm375, %v373, %v357
        %v407 = vsel %vm375, %v374, %v358
        %v408 = vrot.slane %v311, 7
        %v409 = vrot.slane %v313, 7
        %v410 = vrot.slane %v315, 7
        %v411 = vrot.slane %v317, 7
        %v412 = vrot.slane %v319, 7
        %v413 = vrot.slane %v321, 7
        %v414 = vrot.slane %v323, 7
        %v415 = vrot.slane %v325, 7
        %v416 = vrot.slane %v327, 7
        %v417 = vrot.slane %v329, 7
        %v418 = vrot.slane %v331, 7
        %v419 = vrot.slane %v333, 7
        %v420 = vrot.slane %v335, 7
        %v421 = vrot.slane %v337, 7
        %v422 = vrot.slane %v339, 7
        %v423 = vrot.slane %v341, 7
        %v424 = vrot.slane %v312, 7
        %v425 = vrot.slane %v314, 7
        %v426 = vrot.slane %v316, 7
        %v427 = vrot.slane %v318, 7
        %v428 = vrot.slane %v320, 7
        %v429 = vrot.slane %v322, 7
        %v430 = vrot.slane %v324, 7
        %v431 = vrot.slane %v326, 7
        %v432 = vrot.slane %v328, 7
        %v433 = vrot.slane %v330, 7
        %v434 = vrot.slane %v332, 7
        %v435 = vrot.slane %v334, 7
        %v436 = vrot.slane %v336, 7
        %v437 = vrot.slane %v338, 7
        %v438 = vrot.slane %v340, 7
        %v439 = vrot.slane %v342, 7
        %vm440 = vcmp.lt.s32.totalorder %v153, 1
        %v441 = vsel %vm440, %v408, %v424
        %v442 = vsel %vm440, %v409, %v425
        %v443 = vsel %vm440, %v410, %v426
        %v444 = vsel %vm440, %v411, %v427
        %v445 = vsel %vm440, %v412, %v428
        %v446 = vsel %vm440, %v413, %v429
        %v447 = vsel %vm440, %v414, %v430
        %v448 = vsel %vm440, %v415, %v431
        %v449 = vsel %vm440, %v416, %v432
        %v450 = vsel %vm440, %v417, %v433
        %v451 = vsel %vm440, %v418, %v434
        %v452 = vsel %vm440, %v419, %v435
        %v453 = vsel %vm440, %v420, %v436
        %v454 = vsel %vm440, %v421, %v437
        %v455 = vsel %vm440, %v422, %v438
        %v456 = vsel %vm440, %v423, %v439
        %v457 = vsel %vm440, %v424, %v408
        %v458 = vsel %vm440, %v425, %v409
        %v459 = vsel %vm440, %v426, %v410
        %v460 = vsel %vm440, %v427, %v411
        %v461 = vsel %vm440, %v428, %v412
        %v462 = vsel %vm440, %v429, %v413
        %v463 = vsel %vm440, %v430, %v414
        %v464 = vsel %vm440, %v431, %v415
        %v465 = vsel %vm440, %v432, %v416
        %v466 = vsel %vm440, %v433, %v417
        %v467 = vsel %vm440, %v434, %v418
        %v468 = vsel %vm440, %v435, %v419
        %v469 = vsel %vm440, %v436, %v420
        %v470 = vsel %vm440, %v437, %v421
        %v471 = vsel %vm440, %v438, %v422
        %v472 = vsel %vm440, %v439, %v423
        %v473 = vsel %vm155, 1, 0
        %v474 = vsel %vm156, 1, 0
        %vm475 = vcmp.eq.s32.totalorder %v473, 1
        %vm476 = vcmp.eq.s32.totalorder %v474, 1
        %v477 = vsel %vm475, %v376, -inf
        %v478 = vsel %vm476, %v392, -inf
        %v479 = vsel %vm475, %v377, -inf
        %v480 = vsel %vm476, %v393, -inf
        %v481 = vsel %vm475, %v378, -inf
        %v482 = vsel %vm476, %v394, -inf
        %v483 = vsel %vm475, %v379, -inf
        %v484 = vsel %vm476, %v395, -inf
        %v485 = vsel %vm475, %v380, -inf
        %v486 = vsel %vm476, %v396, -inf
        %v487 = vsel %vm475, %v381, -inf
        %v488 = vsel %vm476, %v397, -inf
        %v489 = vsel %vm475, %v382, -inf
        %v490 = vsel %vm476, %v398, -inf
        %v491 = vsel %vm475, %v383, -inf
        %v492 = vsel %vm476, %v399, -inf
        %v493 = vsel %vm475, %v384, -inf
        %v494 = vsel %vm476, %v400, -inf
        %v495 = vsel %vm475, %v385, -inf
        %v496 = vsel %vm476, %v401, -inf
        %v497 = vsel %vm475, %v386, -inf
        %v498 = vsel %vm476, %v402, -inf
        %v499 = vsel %vm475, %v387, -inf
        %v500 = vsel %vm476, %v403, -inf
        %v501 = vsel %vm475, %v388, -inf
        %v502 = vsel %vm476, %v404, -inf
        %v503 = vsel %vm475, %v389, -inf
        %v504 = vsel %vm476, %v405, -inf
        %v505 = vsel %vm475, %v390, -inf
        %v506 = vsel %vm476, %v406, -inf
        %v507 = vsel %vm475, %v391, -inf
        %v508 = vsel %vm476, %v407, -inf
        %v509 = vsel %vm159, 1, 0
        %v510 = vsel %vm160, 1, 0
        %vm511 = vcmp.eq.s32.totalorder %v509, 1
        %vm512 = vcmp.eq.s32.totalorder %v510, 1
        %v513 = vsel %vm511, %v457, -inf
        %v514 = vsel %vm512, %v441, -inf
        %v515 = vsel %vm511, %v458, -inf
        %v516 = vsel %vm512, %v442, -inf
        %v517 = vsel %vm511, %v459, -inf
        %v518 = vsel %vm512, %v443, -inf
        %v519 = vsel %vm511, %v460, -inf
        %v520 = vsel %vm512, %v444, -inf
        %v521 = vsel %vm511, %v461, -inf
        %v522 = vsel %vm512, %v445, -inf
        %v523 = vsel %vm511, %v462, -inf
        %v524 = vsel %vm512, %v446, -inf
        %v525 = vsel %vm511, %v463, -inf
        %v526 = vsel %vm512, %v447, -inf
        %v527 = vsel %vm511, %v464, -inf
        %v528 = vsel %vm512, %v448, -inf
        %v529 = vsel %vm511, %v465, -inf
        %v530 = vsel %vm512, %v449, -inf
        %v531 = vsel %vm511, %v466, -inf
        %v532 = vsel %vm512, %v450, -inf
        %v533 = vsel %vm511, %v467, -inf
        %v534 = vsel %vm512, %v451, -inf
        %v535 = vsel %vm511, %v468, -inf
        %v536 = vsel %vm512, %v452, -inf
        %v537 = vsel %vm511, %v469, -inf
        %v538 = vsel %vm512, %v453, -inf
        %v539 = vsel %vm511, %v470, -inf
        %v540 = vsel %vm512, %v454, -inf
        %v541 = vsel %vm511, %v471, -inf
        %v542 = vsel %vm512, %v455, -inf
        %v543 = vsel %vm511, %v472, -inf
        %v544 = vsel %vm512, %v456, -inf
        %v545 = vmax.f32 %v477, %v513
        %v546 = vmax.f32 %v478, %v514
        %v547 = vmax.f32 %v479, %v515
        %v548 = vmax.f32 %v480, %v516
        %v549 = vmax.f32 %v481, %v517
        %v550 = vmax.f32 %v482, %v518
        %v551 = vmax.f32 %v483, %v519
        %v552 = vmax.f32 %v484, %v520
        %v553 = vmax.f32 %v485, %v521
        %v554 = vmax.f32 %v486, %v522
        %v555 = vmax.f32 %v487, %v523
        %v556 = vmax.f32 %v488, %v524
        %v557 = vmax.f32 %v489, %v525
        %v558 = vmax.f32 %v490, %v526
        %v559 = vmax.f32 %v491, %v527
        %v560 = vmax.f32 %v492, %v528
        %v561 = vmax.f32 %v493, %v529
        %v562 = vmax.f32 %v494, %v530
        %v563 = vmax.f32 %v495, %v531
        %v564 = vmax.f32 %v496, %v532
        %v565 = vmax.f32 %v497, %v533
        %v566 = vmax.f32 %v498, %v534
        %v567 = vmax.f32 %v499, %v535
        %v568 = vmax.f32 %v500, %v536
        %v569 = vmax.f32 %v501, %v537
        %v570 = vmax.f32 %v502, %v538
        %v571 = vmax.f32 %v503, %v539
        %v572 = vmax.f32 %v504, %v540
        %v573 = vmax.f32 %v505, %v541
        %v574 = vmax.f32 %v506, %v542
        %v575 = vmax.f32 %v507, %v543
        %v576 = vmax.f32 %v508, %v544
        %v577 = vmax.f32 %v311, %v545
        %v578 = vmax.f32 %v312, %v546
        %v579 = vmax.f32 %v313, %v547
        %v580 = vmax.f32 %v314, %v548
        %v581 = vmax.f32 %v315, %v549
        %v582 = vmax.f32 %v316, %v550
        %v583 = vmax.f32 %v317, %v551
        %v584 = vmax.f32 %v318, %v552
        %v585 = vmax.f32 %v319, %v553
        %v586 = vmax.f32 %v320, %v554
        %v587 = vmax.f32 %v321, %v555
        %v588 = vmax.f32 %v322, %v556
        %v589 = vmax.f32 %v323, %v557
        %v590 = vmax.f32 %v324, %v558
        %v591 = vmax.f32 %v325, %v559
        %v592 = vmax.f32 %v326, %v560
        %v593 = vmax.f32 %v327, %v561
        %v594 = vmax.f32 %v328, %v562
        %v595 = vmax.f32 %v329, %v563
        %v596 = vmax.f32 %v330, %v564
        %v597 = vmax.f32 %v331, %v565
        %v598 = vmax.f32 %v332, %v566
        %v599 = vmax.f32 %v333, %v567
        %v600 = vmax.f32 %v334, %v568
        %v601 = vmax.f32 %v335, %v569
        %v602 = vmax.f32 %v336, %v570
        %v603 = vmax.f32 %v337, %v571
        %v604 = vmax.f32 %v338, %v572
        %v605 = vmax.f32 %v339, %v573
        %v606 = vmax.f32 %v340, %v574
        %v607 = vmax.f32 %v341, %v575
        %v608 = vmax.f32 %v342, %v576
        %v609 = vrot.slane %v311, 2
        %v610 = vrot.slane %v313, 2
        %v611 = vrot.slane %v315, 2
        %v612 = vrot.slane %v317, 2
        %v613 = vrot.slane %v319, 2
        %v614 = vrot.slane %v321, 2
        %v615 = vrot.slane %v323, 2
        %v616 = vrot.slane %v325, 2
        %v617 = vrot.slane %v327, 2
        %v618 = vrot.slane %v329, 2
        %v619 = vrot.slane %v331, 2
        %v620 = vrot.slane %v333, 2
        %v621 = vrot.slane %v335, 2
        %v622 = vrot.slane %v337, 2
        %v623 = vrot.slane %v339, 2
        %v624 = vrot.slane %v341, 2
        %v625 = vrot.slane %v312, 2
        %v626 = vrot.slane %v314, 2
        %v627 = vrot.slane %v316, 2
        %v628 = vrot.slane %v318, 2
        %v629 = vrot.slane %v320, 2
        %v630 = vrot.slane %v322, 2
        %v631 = vrot.slane %v324, 2
        %v632 = vrot.slane %v326, 2
        %v633 = vrot.slane %v328, 2
        %v634 = vrot.slane %v330, 2
        %v635 = vrot.slane %v332, 2
        %v636 = vrot.slane %v334, 2
        %v637 = vrot.slane %v336, 2
        %v638 = vrot.slane %v338, 2
        %v639 = vrot.slane %v340, 2
        %v640 = vrot.slane %v342, 2
        %vm641 = vcmp.lt.s32.totalorder %v153, 6
        %v642 = vsel %vm641, %v609, %v625
        %v643 = vsel %vm641, %v610, %v626
        %v644 = vsel %vm641, %v611, %v627
        %v645 = vsel %vm641, %v612, %v628
        %v646 = vsel %vm641, %v613, %v629
        %v647 = vsel %vm641, %v614, %v630
        %v648 = vsel %vm641, %v615, %v631
        %v649 = vsel %vm641, %v616, %v632
        %v650 = vsel %vm641, %v617, %v633
        %v651 = vsel %vm641, %v618, %v634
        %v652 = vsel %vm641, %v619, %v635
        %v653 = vsel %vm641, %v620, %v636
        %v654 = vsel %vm641, %v621, %v637
        %v655 = vsel %vm641, %v622, %v638
        %v656 = vsel %vm641, %v623, %v639
        %v657 = vsel %vm641, %v624, %v640
        %v658 = vsel %vm641, %v625, %v609
        %v659 = vsel %vm641, %v626, %v610
        %v660 = vsel %vm641, %v627, %v611
        %v661 = vsel %vm641, %v628, %v612
        %v662 = vsel %vm641, %v629, %v613
        %v663 = vsel %vm641, %v630, %v614
        %v664 = vsel %vm641, %v631, %v615
        %v665 = vsel %vm641, %v632, %v616
        %v666 = vsel %vm641, %v633, %v617
        %v667 = vsel %vm641, %v634, %v618
        %v668 = vsel %vm641, %v635, %v619
        %v669 = vsel %vm641, %v636, %v620
        %v670 = vsel %vm641, %v637, %v621
        %v671 = vsel %vm641, %v638, %v622
        %v672 = vsel %vm641, %v639, %v623
        %v673 = vsel %vm641, %v640, %v624
        %v674 = vrot.slane %v311, 6
        %v675 = vrot.slane %v313, 6
        %v676 = vrot.slane %v315, 6
        %v677 = vrot.slane %v317, 6
        %v678 = vrot.slane %v319, 6
        %v679 = vrot.slane %v321, 6
        %v680 = vrot.slane %v323, 6
        %v681 = vrot.slane %v325, 6
        %v682 = vrot.slane %v327, 6
        %v683 = vrot.slane %v329, 6
        %v684 = vrot.slane %v331, 6
        %v685 = vrot.slane %v333, 6
        %v686 = vrot.slane %v335, 6
        %v687 = vrot.slane %v337, 6
        %v688 = vrot.slane %v339, 6
        %v689 = vrot.slane %v341, 6
        %v690 = vrot.slane %v312, 6
        %v691 = vrot.slane %v314, 6
        %v692 = vrot.slane %v316, 6
        %v693 = vrot.slane %v318, 6
        %v694 = vrot.slane %v320, 6
        %v695 = vrot.slane %v322, 6
        %v696 = vrot.slane %v324, 6
        %v697 = vrot.slane %v326, 6
        %v698 = vrot.slane %v328, 6
        %v699 = vrot.slane %v330, 6
        %v700 = vrot.slane %v332, 6
        %v701 = vrot.slane %v334, 6
        %v702 = vrot.slane %v336, 6
        %v703 = vrot.slane %v338, 6
        %v704 = vrot.slane %v340, 6
        %v705 = vrot.slane %v342, 6
        %vm706 = vcmp.lt.s32.totalorder %v153, 2
        %v707 = vsel %vm706, %v674, %v690
        %v708 = vsel %vm706, %v675, %v691
        %v709 = vsel %vm706, %v676, %v692
        %v710 = vsel %vm706, %v677, %v693
        %v711 = vsel %vm706, %v678, %v694
        %v712 = vsel %vm706, %v679, %v695
        %v713 = vsel %vm706, %v680, %v696
        %v714 = vsel %vm706, %v681, %v697
        %v715 = vsel %vm706, %v682, %v698
        %v716 = vsel %vm706, %v683, %v699
        %v717 = vsel %vm706, %v684, %v700
        %v718 = vsel %vm706, %v685, %v701
        %v719 = vsel %vm706, %v686, %v702
        %v720 = vsel %vm706, %v687, %v703
        %v721 = vsel %vm706, %v688, %v704
        %v722 = vsel %vm706, %v689, %v705
        %v723 = vsel %vm706, %v690, %v674
        %v724 = vsel %vm706, %v691, %v675
        %v725 = vsel %vm706, %v692, %v676
        %v726 = vsel %vm706, %v693, %v677
        %v727 = vsel %vm706, %v694, %v678
        %v728 = vsel %vm706, %v695, %v679
        %v729 = vsel %vm706, %v696, %v680
        %v730 = vsel %vm706, %v697, %v681
        %v731 = vsel %vm706, %v698, %v682
        %v732 = vsel %vm706, %v699, %v683
        %v733 = vsel %vm706, %v700, %v684
        %v734 = vsel %vm706, %v701, %v685
        %v735 = vsel %vm706, %v702, %v686
        %v736 = vsel %vm706, %v703, %v687
        %v737 = vsel %vm706, %v704, %v688
        %v738 = vsel %vm706, %v705, %v689
        %v739 = vsel %vm157, 1, 0
        %v740 = vsel %vm158, 1, 0
        %vm741 = vcmp.eq.s32.totalorder %v739, 1
        %vm742 = vcmp.eq.s32.totalorder %v740, 1
        %v743 = vsel %vm741, %v642, -inf
        %v744 = vsel %vm742, %v658, -inf
        %v745 = vsel %vm741, %v643, -inf
        %v746 = vsel %vm742, %v659, -inf
        %v747 = vsel %vm741, %v644, -inf
        %v748 = vsel %vm742, %v660, -inf
        %v749 = vsel %vm741, %v645, -inf
        %v750 = vsel %vm742, %v661, -inf
        %v751 = vsel %vm741, %v646, -inf
        %v752 = vsel %vm742, %v662, -inf
        %v753 = vsel %vm741, %v647, -inf
        %v754 = vsel %vm742, %v663, -inf
        %v755 = vsel %vm741, %v648, -inf
        %v756 = vsel %vm742, %v664, -inf
        %v757 = vsel %vm741, %v649, -inf
        %v758 = vsel %vm742, %v665, -inf
        %v759 = vsel %vm741, %v650, -inf
        %v760 = vsel %vm742, %v666, -inf
        %v761 = vsel %vm741, %v651, -inf
        %v762 = vsel %vm742, %v667, -inf
        %v763 = vsel %vm741, %v652, -inf
        %v764 = vsel %vm742, %v668, -inf
        %v765 = vsel %vm741, %v653, -inf
        %v766 = vsel %vm742, %v669, -inf
        %v767 = vsel %vm741, %v654, -inf
        %v768 = vsel %vm742, %v670, -inf
        %v769 = vsel %vm741, %v655, -inf
        %v770 = vsel %vm742, %v671, -inf
        %v771 = vsel %vm741, %v656, -inf
        %v772 = vsel %vm742, %v672, -inf
        %v773 = vsel %vm741, %v657, -inf
        %v774 = vsel %vm742, %v673, -inf
        %v775 = vsel %vm161, 1, 0
        %v776 = vsel %vm162, 1, 0
        %vm777 = vcmp.eq.s32.totalorder %v775, 1
        %vm778 = vcmp.eq.s32.totalorder %v776, 1
        %v779 = vsel %vm777, %v723, -inf
        %v780 = vsel %vm778, %v707, -inf
        %v781 = vsel %vm777, %v724, -inf
        %v782 = vsel %vm778, %v708, -inf
        %v783 = vsel %vm777, %v725, -inf
        %v784 = vsel %vm778, %v709, -inf
        %v785 = vsel %vm777, %v726, -inf
        %v786 = vsel %vm778, %v710, -inf
        %v787 = vsel %vm777, %v727, -inf
        %v788 = vsel %vm778, %v711, -inf
        %v789 = vsel %vm777, %v728, -inf
        %v790 = vsel %vm778, %v712, -inf
        %v791 = vsel %vm777, %v729, -inf
        %v792 = vsel %vm778, %v713, -inf
        %v793 = vsel %vm777, %v730, -inf
        %v794 = vsel %vm778, %v714, -inf
        %v795 = vsel %vm777, %v731, -inf
        %v796 = vsel %vm778, %v715, -inf
        %v797 = vsel %vm777, %v732, -inf
        %v798 = vsel %vm778, %v716, -inf
        %v799 = vsel %vm777, %v733, -inf
        %v800 = vsel %vm778, %v717, -inf
        %v801 = vsel %vm777, %v734, -inf
        %v802 = vsel %vm778, %v718, -inf
        %v803 = vsel %vm777, %v735, -inf
        %v804 = vsel %vm778, %v719, -inf
        %v805 = vsel %vm777, %v736, -inf
        %v806 = vsel %vm778, %v720, -inf
        %v807 = vsel %vm777, %v737, -inf
        %v808 = vsel %vm778, %v721, -inf
        %v809 = vsel %vm777, %v738, -inf
        %v810 = vsel %vm778, %v722, -inf
        %v811 = vmax.f32 %v743, %v779
        %v812 = vmax.f32 %v744, %v780
        %v813 = vmax.f32 %v745, %v781
        %v814 = vmax.f32 %v746, %v782
        %v815 = vmax.f32 %v747, %v783
        %v816 = vmax.f32 %v748, %v784
        %v817 = vmax.f32 %v749, %v785
        %v818 = vmax.f32 %v750, %v786
        %v819 = vmax.f32 %v751, %v787
        %v820 = vmax.f32 %v752, %v788
        %v821 = vmax.f32 %v753, %v789
        %v822 = vmax.f32 %v754, %v790
        %v823 = vmax.f32 %v755, %v791
        %v824 = vmax.f32 %v756, %v792
        %v825 = vmax.f32 %v757, %v793
        %v826 = vmax.f32 %v758, %v794
        %v827 = vmax.f32 %v759, %v795
        %v828 = vmax.f32 %v760, %v796
        %v829 = vmax.f32 %v761, %v797
        %v830 = vmax.f32 %v762, %v798
        %v831 = vmax.f32 %v763, %v799
        %v832 = vmax.f32 %v764, %v800
        %v833 = vmax.f32 %v765, %v801
        %v834 = vmax.f32 %v766, %v802
        %v835 = vmax.f32 %v767, %v803
        %v836 = vmax.f32 %v768, %v804
        %v837 = vmax.f32 %v769, %v805
        %v838 = vmax.f32 %v770, %v806
        %v839 = vmax.f32 %v771, %v807
        %v840 = vmax.f32 %v772, %v808
        %v841 = vmax.f32 %v773, %v809
        %v842 = vmax.f32 %v774, %v810
        %v843 = vmax.f32 %v577, %v811
        %v844 = vmax.f32 %v578, %v812
        %v845 = vmax.f32 %v579, %v813
        %v846 = vmax.f32 %v580, %v814
        %v847 = vmax.f32 %v581, %v815
        %v848 = vmax.f32 %v582, %v816
        %v849 = vmax.f32 %v583, %v817
        %v850 = vmax.f32 %v584, %v818
        %v851 = vmax.f32 %v585, %v819
        %v852 = vmax.f32 %v586, %v820
        %v853 = vmax.f32 %v587, %v821
        %v854 = vmax.f32 %v588, %v822
        %v855 = vmax.f32 %v589, %v823
        %v856 = vmax.f32 %v590, %v824
        %v857 = vmax.f32 %v591, %v825
        %v858 = vmax.f32 %v592, %v826
        %v859 = vmax.f32 %v593, %v827
        %v860 = vmax.f32 %v594, %v828
        %v861 = vmax.f32 %v595, %v829
        %v862 = vmax.f32 %v596, %v830
        %v863 = vmax.f32 %v597, %v831
        %v864 = vmax.f32 %v598, %v832
        %v865 = vmax.f32 %v599, %v833
        %v866 = vmax.f32 %v600, %v834
        %v867 = vmax.f32 %v601, %v835
        %v868 = vmax.f32 %v602, %v836
        %v869 = vmax.f32 %v603, %v837
        %v870 = vmax.f32 %v604, %v838
        %v871 = vmax.f32 %v605, %v839
        %v872 = vmax.f32 %v606, %v840
        %v873 = vmax.f32 %v607, %v841
        %v874 = vmax.f32 %v608, %v842
        %s875 = scalar_lea.vmem %s151, 256 [#allocation5]
        %876 = vst [vmem:[%s875] sm:$0xff] %v843
        %877 = vst [vmem:[%s875 + $0x8] sm:$0xff] %v844
        %878 = vst [vmem:[%s875 + $0x10] sm:$0xff] %v845
        %879 = vst [vmem:[%s875 + $0x18] sm:$0xff] %v846
        %880 = vst [vmem:[%s875 + $0x20] sm:$0xff] %v847
        %881 = vst [vmem:[%s875 + $0x28] sm:$0xff] %v848
        %882 = vst [vmem:[%s875 + $0x30] sm:$0xff] %v849
        %883 = vst [vmem:[%s875 + $0x38] sm:$0xff] %v850
        %884 = vst [vmem:[%s875 + $0x40] sm:$0xff] %v851
        %885 = vst [vmem:[%s875 + $0x48] sm:$0xff] %v852
        %886 = vst [vmem:[%s875 + $0x50] sm:$0xff] %v853
        %887 = vst [vmem:[%s875 + $0x58] sm:$0xff] %v854
        %888 = vst [vmem:[%s875 + $0x60] sm:$0xff] %v855
        %889 = vst [vmem:[%s875 + $0x68] sm:$0xff] %v856
        %890 = vst [vmem:[%s875 + $0x70] sm:$0xff] %v857
        %891 = vst [vmem:[%s875 + $0x78] sm:$0xff] %v858
        %892 = vst [vmem:[%s875 + $0x80] sm:$0xff] %v859
        %893 = vst [vmem:[%s875 + $0x88] sm:$0xff] %v860
        %894 = vst [vmem:[%s875 + $0x90] sm:$0xff] %v861
        %895 = vst [vmem:[%s875 + $0x98] sm:$0xff] %v862
        %896 = vst [vmem:[%s875 + $0xa0] sm:$0xff] %v863
        %897 = vst [vmem:[%s875 + $0xa8] sm:$0xff] %v864
        %898 = vst [vmem:[%s875 + $0xb0] sm:$0xff] %v865
        %899 = vst [vmem:[%s875 + $0xb8] sm:$0xff] %v866
        %900 = vst [vmem:[%s875 + $0xc0] sm:$0xff] %v867
        %901 = vst [vmem:[%s875 + $0xc8] sm:$0xff] %v868
        %902 = vst [vmem:[%s875 + $0xd0] sm:$0xff] %v869
        %903 = vst [vmem:[%s875 + $0xd8] sm:$0xff] %v870
        %904 = vst [vmem:[%s875 + $0xe0] sm:$0xff] %v871
        %905 = vst [vmem:[%s875 + $0xe8] sm:$0xff] %v872
        %906 = vst [vmem:[%s875 + $0xf0] sm:$0xff] %v873
        %907 = vst [vmem:[%s875 + $0xf8] sm:$0xff] %v874
        %v908 = vmax.f32 %v847, %v843
        %v909 = vmax.f32 %v848, %v844
        %v910 = vmax.f32 %v849, %v845
        %v911 = vmax.f32 %v850, %v846
        %v912 = vmax.f32 %v851, %v847
        %v913 = vmax.f32 %v852, %v848
        %v914 = vmax.f32 %v853, %v849
        %v915 = vmax.f32 %v854, %v850
        %v916 = vmax.f32 %v855, %v851
        %v917 = vmax.f32 %v856, %v852
        %v918 = vmax.f32 %v857, %v853
        %v919 = vmax.f32 %v858, %v854
        %v920 = vmax.f32 %v859, %v855
        %v921 = vmax.f32 %v860, %v856
        %v922 = vmax.f32 %v861, %v857
        %v923 = vmax.f32 %v862, %v858
        %v924 = vmax.f32 %v863, %v859
        %v925 = vmax.f32 %v864, %v860
        %v926 = vmax.f32 %v865, %v861
        %v927 = vmax.f32 %v866, %v862
        %v928 = vmax.f32 %v867, %v863
        %v929 = vmax.f32 %v868, %v864
        %v930 = vmax.f32 %v869, %v865
        %v931 = vmax.f32 %v870, %v866
        %v932 = vmax.f32 %v871, %v867
        %v933 = vmax.f32 %v872, %v868
        %v934 = vmax.f32 %v873, %v869
        %v935 = vmax.f32 %v874, %v870
        %v936 = vmax.f32 %v843, %v845
        %v937 = vmax.f32 %v844, %v846
        %v938 = vmax.f32 %v845, %v908
        %v939 = vmax.f32 %v846, %v909
        %v940 = vmax.f32 %v847, %v910
        %v941 = vmax.f32 %v848, %v911
        %v942 = vmax.f32 %v849, %v912
        %v943 = vmax.f32 %v850, %v913
        %v944 = vmax.f32 %v851, %v914
        %v945 = vmax.f32 %v852, %v915
        %v946 = vmax.f32 %v853, %v916
        %v947 = vmax.f32 %v854, %v917
        %v948 = vmax.f32 %v855, %v918
        %v949 = vmax.f32 %v856, %v919
        %v950 = vmax.f32 %v857, %v920
        %v951 = vmax.f32 %v858, %v921
        %v952 = vmax.f32 %v859, %v922
        %v953 = vmax.f32 %v860, %v923
        %v954 = vmax.f32 %v861, %v924
        %v955 = vmax.f32 %v862, %v925
        %v956 = vmax.f32 %v863, %v926
        %v957 = vmax.f32 %v864, %v927
        %v958 = vmax.f32 %v865, %v928
        %v959 = vmax.f32 %v866, %v929
        %v960 = vmax.f32 %v867, %v930
        %v961 = vmax.f32 %v868, %v931
        %v962 = vmax.f32 %v869, %v932
        %v963 = vmax.f32 %v870, %v933
        %v964 = vmax.f32 %v871, %v934
        %v965 = vmax.f32 %v872, %v935
        %v966 = vmax.f32 %v873, %v871
        %v967 = vmax.f32 %v874, %v872
        %v968 = vmax.f32 %v851, %v843
        %v969 = vmax.f32 %v852, %v844
        %v970 = vmax.f32 %v853, %v845
        %v971 = vmax.f32 %v854, %v846
        %v972 = vmax.f32 %v855, %v847
        %v973 = vmax.f32 %v856, %v848
        %v974 = vmax.f32 %v857, %v849
        %v975 = vmax.f32 %v858, %v850
        %v976 = vmax.f32 %v859, %v851
        %v977 = vmax.f32 %v860, %v852
        %v978 = vmax.f32 %v861, %v853
        %v979 = vmax.f32 %v862, %v854
        %v980 = vmax.f32 %v863, %v855
        %v981 = vmax.f32 %v864, %v856
        %v982 = vmax.f32 %v865, %v857
        %v983 = vmax.f32 %v866, %v858
        %v984 = vmax.f32 %v867, %v859
        %v985 = vmax.f32 %v868, %v860
        %v986 = vmax.f32 %v869, %v861
        %v987 = vmax.f32 %v870, %v862
        %v988 = vmax.f32 %v871, %v863
        %v989 = vmax.f32 %v872, %v864
        %v990 = vmax.f32 %v873, %v865
        %v991 = vmax.f32 %v874, %v866
        %v992 = vmax.f32 %v936, %v847
        %v993 = vmax.f32 %v937, %v848
        %v994 = vmax.f32 %v938, %v849
        %v995 = vmax.f32 %v939, %v850
        %v996 = vmax.f32 %v940, %v968
        %v997 = vmax.f32 %v941, %v969
        %v998 = vmax.f32 %v942, %v970
        %v999 = vmax.f32 %v943, %v971
        %v1000 = vmax.f32 %v944, %v972
        %v1001 = vmax.f32 %v945, %v973
        %v1002 = vmax.f32 %v946, %v974
        %v1003 = vmax.f32 %v947, %v975
        %v1004 = vmax.f32 %v948, %v976
        %v1005 = vmax.f32 %v949, %v977
        %v1006 = vmax.f32 %v950, %v978
        %v1007 = vmax.f32 %v951, %v979
        %v1008 = vmax.f32 %v952, %v980
        %v1009 = vmax.f32 %v953, %v981
        %v1010 = vmax.f32 %v954, %v982
        %v1011 = vmax.f32 %v955, %v983
        %v1012 = vmax.f32 %v956, %v984
        %v1013 = vmax.f32 %v957, %v985
        %v1014 = vmax.f32 %v958, %v986
        %v1015 = vmax.f32 %v959, %v987
        %v1016 = vmax.f32 %v960, %v988
        %v1017 = vmax.f32 %v961, %v989
        %v1018 = vmax.f32 %v962, %v990
        %v1019 = vmax.f32 %v963, %v991
        %v1020 = vmax.f32 %v964, %v867
        %v1021 = vmax.f32 %v965, %v868
        %v1022 = vmax.f32 %v966, %v869
        %v1023 = vmax.f32 %v967, %v870
        %v1024 = vrot.slane %v992, 1
        %v1025 = vrot.slane %v994, 1
        %v1026 = vrot.slane %v996, 1
        %v1027 = vrot.slane %v998, 1
        %v1028 = vrot.slane %v1000, 1
        %v1029 = vrot.slane %v1002, 1
        %v1030 = vrot.slane %v1004, 1
        %v1031 = vrot.slane %v1006, 1
        %v1032 = vrot.slane %v1008, 1
        %v1033 = vrot.slane %v1010, 1
        %v1034 = vrot.slane %v1012, 1
        %v1035 = vrot.slane %v1014, 1
        %v1036 = vrot.slane %v1016, 1
        %v1037 = vrot.slane %v1018, 1
        %v1038 = vrot.slane %v1020, 1
        %v1039 = vrot.slane %v1022, 1
        %v1040 = vrot.slane %v993, 1
        %v1041 = vrot.slane %v995, 1
        %v1042 = vrot.slane %v997, 1
        %v1043 = vrot.slane %v999, 1
        %v1044 = vrot.slane %v1001, 1
        %v1045 = vrot.slane %v1003, 1
        %v1046 = vrot.slane %v1005, 1
        %v1047 = vrot.slane %v1007, 1
        %v1048 = vrot.slane %v1009, 1
        %v1049 = vrot.slane %v1011, 1
        %v1050 = vrot.slane %v1013, 1
        %v1051 = vrot.slane %v1015, 1
        %v1052 = vrot.slane %v1017, 1
        %v1053 = vrot.slane %v1019, 1
        %v1054 = vrot.slane %v1021, 1
        %v1055 = vrot.slane %v1023, 1
        %v1056 = vsel %vm375, %v1024, %v1040
        %v1057 = vsel %vm375, %v1025, %v1041
        %v1058 = vsel %vm375, %v1026, %v1042
        %v1059 = vsel %vm375, %v1027, %v1043
        %v1060 = vsel %vm375, %v1028, %v1044
        %v1061 = vsel %vm375, %v1029, %v1045
        %v1062 = vsel %vm375, %v1030, %v1046
        %v1063 = vsel %vm375, %v1031, %v1047
        %v1064 = vsel %vm375, %v1032, %v1048
        %v1065 = vsel %vm375, %v1033, %v1049
        %v1066 = vsel %vm375, %v1034, %v1050
        %v1067 = vsel %vm375, %v1035, %v1051
        %v1068 = vsel %vm375, %v1036, %v1052
        %v1069 = vsel %vm375, %v1037, %v1053
        %v1070 = vsel %vm375, %v1038, %v1054
        %v1071 = vsel %vm375, %v1039, %v1055
        %v1072 = vsel %vm375, %v1040, %v1024
        %v1073 = vsel %vm375, %v1041, %v1025
        %v1074 = vsel %vm375, %v1042, %v1026
        %v1075 = vsel %vm375, %v1043, %v1027
        %v1076 = vsel %vm375, %v1044, %v1028
        %v1077 = vsel %vm375, %v1045, %v1029
        %v1078 = vsel %vm375, %v1046, %v1030
        %v1079 = vsel %vm375, %v1047, %v1031
        %v1080 = vsel %vm375, %v1048, %v1032
        %v1081 = vsel %vm375, %v1049, %v1033
        %v1082 = vsel %vm375, %v1050, %v1034
        %v1083 = vsel %vm375, %v1051, %v1035
        %v1084 = vsel %vm375, %v1052, %v1036
        %v1085 = vsel %vm375, %v1053, %v1037
        %v1086 = vsel %vm375, %v1054, %v1038
        %v1087 = vsel %vm375, %v1055, %v1039
        %v1088 = vrot.slane %v992, 7
        %v1089 = vrot.slane %v994, 7
        %v1090 = vrot.slane %v996, 7
        %v1091 = vrot.slane %v998, 7
        %v1092 = vrot.slane %v1000, 7
        %v1093 = vrot.slane %v1002, 7
        %v1094 = vrot.slane %v1004, 7
        %v1095 = vrot.slane %v1006, 7
        %v1096 = vrot.slane %v1008, 7
        %v1097 = vrot.slane %v1010, 7
        %v1098 = vrot.slane %v1012, 7
        %v1099 = vrot.slane %v1014, 7
        %v1100 = vrot.slane %v1016, 7
        %v1101 = vrot.slane %v1018, 7
        %v1102 = vrot.slane %v1020, 7
        %v1103 = vrot.slane %v1022, 7
        %v1104 = vrot.slane %v993, 7
        %v1105 = vrot.slane %v995, 7
        %v1106 = vrot.slane %v997, 7
        %v1107 = vrot.slane %v999, 7
        %v1108 = vrot.slane %v1001, 7
        %v1109 = vrot.slane %v1003, 7
        %v1110 = vrot.slane %v1005, 7
        %v1111 = vrot.slane %v1007, 7
        %v1112 = vrot.slane %v1009, 7
        %v1113 = vrot.slane %v1011, 7
        %v1114 = vrot.slane %v1013, 7
        %v1115 = vrot.slane %v1015, 7
        %v1116 = vrot.slane %v1017, 7
        %v1117 = vrot.slane %v1019, 7
        %v1118 = vrot.slane %v1021, 7
        %v1119 = vrot.slane %v1023, 7
        %v1120 = vsel %vm440, %v1088, %v1104
        %v1121 = vsel %vm440, %v1089, %v1105
        %v1122 = vsel %vm440, %v1090, %v1106
        %v1123 = vsel %vm440, %v1091, %v1107
        %v1124 = vsel %vm440, %v1092, %v1108
        %v1125 = vsel %vm440, %v1093, %v1109
        %v1126 = vsel %vm440, %v1094, %v1110
        %v1127 = vsel %vm440, %v1095, %v1111
        %v1128 = vsel %vm440, %v1096, %v1112
        %v1129 = vsel %vm440, %v1097, %v1113
        %v1130 = vsel %vm440, %v1098, %v1114
        %v1131 = vsel %vm440, %v1099, %v1115
        %v1132 = vsel %vm440, %v1100, %v1116
        %v1133 = vsel %vm440, %v1101, %v1117
        %v1134 = vsel %vm440, %v1102, %v1118
        %v1135 = vsel %vm440, %v1103, %v1119
        %v1136 = vsel %vm440, %v1104, %v1088
        %v1137 = vsel %vm440, %v1105, %v1089
        %v1138 = vsel %vm440, %v1106, %v1090
        %v1139 = vsel %vm440, %v1107, %v1091
        %v1140 = vsel %vm440, %v1108, %v1092
        %v1141 = vsel %vm440, %v1109, %v1093
        %v1142 = vsel %vm440, %v1110, %v1094
        %v1143 = vsel %vm440, %v1111, %v1095
        %v1144 = vsel %vm440, %v1112, %v1096
        %v1145 = vsel %vm440, %v1113, %v1097
        %v1146 = vsel %vm440, %v1114, %v1098
        %v1147 = vsel %vm440, %v1115, %v1099
        %v1148 = vsel %vm440, %v1116, %v1100
        %v1149 = vsel %vm440, %v1117, %v1101
        %v1150 = vsel %vm440, %v1118, %v1102
        %v1151 = vsel %vm440, %v1119, %v1103
        %v1152 = vsel %vm475, %v1056, -inf
        %v1153 = vsel %vm476, %v1072, -inf
        %v1154 = vsel %vm475, %v1057, -inf
        %v1155 = vsel %vm476, %v1073, -inf
        %v1156 = vsel %vm475, %v1058, -inf
        %v1157 = vsel %vm476, %v1074, -inf
        %v1158 = vsel %vm475, %v1059, -inf
        %v1159 = vsel %vm476, %v1075, -inf
        %v1160 = vsel %vm475, %v1060, -inf
        %v1161 = vsel %vm476, %v1076, -inf
        %v1162 = vsel %vm475, %v1061, -inf
        %v1163 = vsel %vm476, %v1077, -inf
        %v1164 = vsel %vm475, %v1062, -inf
        %v1165 = vsel %vm476, %v1078, -inf
        %v1166 = vsel %vm475, %v1063, -inf
        %v1167 = vsel %vm476, %v1079, -inf
        %v1168 = vsel %vm475, %v1064, -inf
        %v1169 = vsel %vm476, %v1080, -inf
        %v1170 = vsel %vm475, %v1065, -inf
        %v1171 = vsel %vm476, %v1081, -inf
        %v1172 = vsel %vm475, %v1066, -inf
        %v1173 = vsel %vm476, %v1082, -inf
        %v1174 = vsel %vm475, %v1067, -inf
        %v1175 = vsel %vm476, %v1083, -inf
        %v1176 = vsel %vm475, %v1068, -inf
        %v1177 = vsel %vm476, %v1084, -inf
        %v1178 = vsel %vm475, %v1069, -inf
        %v1179 = vsel %vm476, %v1085, -inf
        %v1180 = vsel %vm475, %v1070, -inf
        %v1181 = vsel %vm476, %v1086, -inf
        %v1182 = vsel %vm475, %v1071, -inf
        %v1183 = vsel %vm476, %v1087, -inf
        %v1184 = vsel %vm511, %v1136, -inf
        %v1185 = vsel %vm512, %v1120, -inf
        %v1186 = vsel %vm511, %v1137, -inf
        %v1187 = vsel %vm512, %v1121, -inf
        %v1188 = vsel %vm511, %v1138, -inf
        %v1189 = vsel %vm512, %v1122, -inf
        %v1190 = vsel %vm511, %v1139, -inf
        %v1191 = vsel %vm512, %v1123, -inf
        %v1192 = vsel %vm511, %v1140, -inf
        %v1193 = vsel %vm512, %v1124, -inf
        %v1194 = vsel %vm511, %v1141, -inf
        %v1195 = vsel %vm512, %v1125, -inf
        %v1196 = vsel %vm511, %v1142, -inf
        %v1197 = vsel %vm512, %v1126, -inf
        %v1198 = vsel %vm511, %v1143, -inf
        %v1199 = vsel %vm512, %v1127, -inf
        %v1200 = vsel %vm511, %v1144, -inf
        %v1201 = vsel %vm512, %v1128, -inf
        %v1202 = vsel %vm511, %v1145, -inf
        %v1203 = vsel %vm512, %v1129, -inf
        %v1204 = vsel %vm511, %v1146, -inf
        %v1205 = vsel %vm512, %v1130, -inf
        %v1206 = vsel %vm511, %v1147, -inf
        %v1207 = vsel %vm512, %v1131, -inf
        %v1208 = vsel %vm511, %v1148, -inf
        %v1209 = vsel %vm512, %v1132, -inf
        %v1210 = vsel %vm511, %v1149, -inf
        %v1211 = vsel %vm512, %v1133, -inf
        %v1212 = vsel %vm511, %v1150, -inf
        %v1213 = vsel %vm512, %v1134, -inf
        %v1214 = vsel %vm511, %v1151, -inf
        %v1215 = vsel %vm512, %v1135, -inf
        %v1216 = vmax.f32 %v1152, %v1184
        %v1217 = vmax.f32 %v1153, %v1185
        %v1218 = vmax.f32 %v1154, %v1186
        %v1219 = vmax.f32 %v1155, %v1187
        %v1220 = vmax.f32 %v1156, %v1188
        %v1221 = vmax.f32 %v1157, %v1189
        %v1222 = vmax.f32 %v1158, %v1190
        %v1223 = vmax.f32 %v1159, %v1191
        %v1224 = vmax.f32 %v1160, %v1192
        %v1225 = vmax.f32 %v1161, %v1193
        %v1226 = vmax.f32 %v1162, %v1194
        %v1227 = vmax.f32 %v1163, %v1195
        %v1228 = vmax.f32 %v1164, %v1196
        %v1229 = vmax.f32 %v1165, %v1197
        %v1230 = vmax.f32 %v1166, %v1198
        %v1231 = vmax.f32 %v1167, %v1199
        %v1232 = vmax.f32 %v1168, %v1200
        %v1233 = vmax.f32 %v1169, %v1201
        %v1234 = vmax.f32 %v1170, %v1202
        %v1235 = vmax.f32 %v1171, %v1203
        %v1236 = vmax.f32 %v1172, %v1204
        %v1237 = vmax.f32 %v1173, %v1205
        %v1238 = vmax.f32 %v1174, %v1206
        %v1239 = vmax.f32 %v1175, %v1207
        %v1240 = vmax.f32 %v1176, %v1208
        %v1241 = vmax.f32 %v1177, %v1209
        %v1242 = vmax.f32 %v1178, %v1210
        %v1243 = vmax.f32 %v1179, %v1211
        %v1244 = vmax.f32 %v1180, %v1212
        %v1245 = vmax.f32 %v1181, %v1213
        %v1246 = vmax.f32 %v1182, %v1214
        %v1247 = vmax.f32 %v1183, %v1215
        %v1248 = vmax.f32 %v992, %v1216
        %v1249 = vmax.f32 %v993, %v1217
        %v1250 = vmax.f32 %v994, %v1218
        %v1251 = vmax.f32 %v995, %v1219
        %v1252 = vmax.f32 %v996, %v1220
        %v1253 = vmax.f32 %v997, %v1221
        %v1254 = vmax.f32 %v998, %v1222
        %v1255 = vmax.f32 %v999, %v1223
        %v1256 = vmax.f32 %v1000, %v1224
        %v1257 = vmax.f32 %v1001, %v1225
        %v1258 = vmax.f32 %v1002, %v1226
        %v1259 = vmax.f32 %v1003, %v1227
        %v1260 = vmax.f32 %v1004, %v1228
        %v1261 = vmax.f32 %v1005, %v1229
        %v1262 = vmax.f32 %v1006, %v1230
        %v1263 = vmax.f32 %v1007, %v1231
        %v1264 = vmax.f32 %v1008, %v1232
        %v1265 = vmax.f32 %v1009, %v1233
        %v1266 = vmax.f32 %v1010, %v1234
        %v1267 = vmax.f32 %v1011, %v1235
        %v1268 = vmax.f32 %v1012, %v1236
        %v1269 = vmax.f32 %v1013, %v1237
        %v1270 = vmax.f32 %v1014, %v1238
        %v1271 = vmax.f32 %v1015, %v1239
        %v1272 = vmax.f32 %v1016, %v1240
        %v1273 = vmax.f32 %v1017, %v1241
        %v1274 = vmax.f32 %v1018, %v1242
        %v1275 = vmax.f32 %v1019, %v1243
        %v1276 = vmax.f32 %v1020, %v1244
        %v1277 = vmax.f32 %v1021, %v1245
        %v1278 = vmax.f32 %v1022, %v1246
        %v1279 = vmax.f32 %v1023, %v1247
        %v1280 = vrot.slane %v992, 2
        %v1281 = vrot.slane %v994, 2
        %v1282 = vrot.slane %v996, 2
        %v1283 = vrot.slane %v998, 2
        %v1284 = vrot.slane %v1000, 2
        %v1285 = vrot.slane %v1002, 2
        %v1286 = vrot.slane %v1004, 2
        %v1287 = vrot.slane %v1006, 2
        %v1288 = vrot.slane %v1008, 2
        %v1289 = vrot.slane %v1010, 2
        %v1290 = vrot.slane %v1012, 2
        %v1291 = vrot.slane %v1014, 2
        %v1292 = vrot.slane %v1016, 2
        %v1293 = vrot.slane %v1018, 2
        %v1294 = vrot.slane %v1020, 2
        %v1295 = vrot.slane %v1022, 2
        %v1296 = vrot.slane %v993, 2
        %v1297 = vrot.slane %v995, 2
        %v1298 = vrot.slane %v997, 2
        %v1299 = vrot.slane %v999, 2
        %v1300 = vrot.slane %v1001, 2
        %v1301 = vrot.slane %v1003, 2
        %v1302 = vrot.slane %v1005, 2
        %v1303 = vrot.slane %v1007, 2
        %v1304 = vrot.slane %v1009, 2
        %v1305 = vrot.slane %v1011, 2
        %v1306 = vrot.slane %v1013, 2
        %v1307 = vrot.slane %v1015, 2
        %v1308 = vrot.slane %v1017, 2
        %v1309 = vrot.slane %v1019, 2
        %v1310 = vrot.slane %v1021, 2
        %v1311 = vrot.slane %v1023, 2
        %v1312 = vsel %vm641, %v1280, %v1296
        %v1313 = vsel %vm641, %v1281, %v1297
        %v1314 = vsel %vm641, %v1282, %v1298
        %v1315 = vsel %vm641, %v1283, %v1299
        %v1316 = vsel %vm641, %v1284, %v1300
        %v1317 = vsel %vm641, %v1285, %v1301
        %v1318 = vsel %vm641, %v1286, %v1302
        %v1319 = vsel %vm641, %v1287, %v1303
        %v1320 = vsel %vm641, %v1288, %v1304
        %v1321 = vsel %vm641, %v1289, %v1305
        %v1322 = vsel %vm641, %v1290, %v1306
        %v1323 = vsel %vm641, %v1291, %v1307
        %v1324 = vsel %vm641, %v1292, %v1308
        %v1325 = vsel %vm641, %v1293, %v1309
        %v1326 = vsel %vm641, %v1294, %v1310
        %v1327 = vsel %vm641, %v1295, %v1311
        %v1328 = vsel %vm641, %v1296, %v1280
        %v1329 = vsel %vm641, %v1297, %v1281
        %v1330 = vsel %vm641, %v1298, %v1282
        %v1331 = vsel %vm641, %v1299, %v1283
        %v1332 = vsel %vm641, %v1300, %v1284
        %v1333 = vsel %vm641, %v1301, %v1285
        %v1334 = vsel %vm641, %v1302, %v1286
        %v1335 = vsel %vm641, %v1303, %v1287
        %v1336 = vsel %vm641, %v1304, %v1288
        %v1337 = vsel %vm641, %v1305, %v1289
        %v1338 = vsel %vm641, %v1306, %v1290
        %v1339 = vsel %vm641, %v1307, %v1291
        %v1340 = vsel %vm641, %v1308, %v1292
        %v1341 = vsel %vm641, %v1309, %v1293
        %v1342 = vsel %vm641, %v1310, %v1294
        %v1343 = vsel %vm641, %v1311, %v1295
        %v1344 = vrot.slane %v992, 6
        %v1345 = vrot.slane %v994, 6
        %v1346 = vrot.slane %v996, 6
        %v1347 = vrot.slane %v998, 6
        %v1348 = vrot.slane %v1000, 6
        %v1349 = vrot.slane %v1002, 6
        %v1350 = vrot.slane %v1004, 6
        %v1351 = vrot.slane %v1006, 6
        %v1352 = vrot.slane %v1008, 6
        %v1353 = vrot.slane %v1010, 6
        %v1354 = vrot.slane %v1012, 6
        %v1355 = vrot.slane %v1014, 6
        %v1356 = vrot.slane %v1016, 6
        %v1357 = vrot.slane %v1018, 6
        %v1358 = vrot.slane %v1020, 6
        %v1359 = vrot.slane %v1022, 6
        %v1360 = vrot.slane %v993, 6
        %v1361 = vrot.slane %v995, 6
        %v1362 = vrot.slane %v997, 6
        %v1363 = vrot.slane %v999, 6
        %v1364 = vrot.slane %v1001, 6
        %v1365 = vrot.slane %v1003, 6
        %v1366 = vrot.slane %v1005, 6
        %v1367 = vrot.slane %v1007, 6
        %v1368 = vrot.slane %v1009, 6
        %v1369 = vrot.slane %v1011, 6
        %v1370 = vrot.slane %v1013, 6
        %v1371 = vrot.slane %v1015, 6
        %v1372 = vrot.slane %v1017, 6
        %v1373 = vrot.slane %v1019, 6
        %v1374 = vrot.slane %v1021, 6
        %v1375 = vrot.slane %v1023, 6
        %v1376 = vsel %vm706, %v1344, %v1360
        %v1377 = vsel %vm706, %v1345, %v1361
        %v1378 = vsel %vm706, %v1346, %v1362
        %v1379 = vsel %vm706, %v1347, %v1363
        %v1380 = vsel %vm706, %v1348, %v1364
        %v1381 = vsel %vm706, %v1349, %v1365
        %v1382 = vsel %vm706, %v1350, %v1366
        %v1383 = vsel %vm706, %v1351, %v1367
        %v1384 = vsel %vm706, %v1352, %v1368
        %v1385 = vsel %vm706, %v1353, %v1369
        %v1386 = vsel %vm706, %v1354, %v1370
        %v1387 = vsel %vm706, %v1355, %v1371
        %v1388 = vsel %vm706, %v1356, %v1372
        %v1389 = vsel %vm706, %v1357, %v1373
        %v1390 = vsel %vm706, %v1358, %v1374
        %v1391 = vsel %vm706, %v1359, %v1375
        %v1392 = vsel %vm706, %v1360, %v1344
        %v1393 = vsel %vm706, %v1361, %v1345
        %v1394 = vsel %vm706, %v1362, %v1346
        %v1395 = vsel %vm706, %v1363, %v1347
        %v1396 = vsel %vm706, %v1364, %v1348
        %v1397 = vsel %vm706, %v1365, %v1349
        %v1398 = vsel %vm706, %v1366, %v1350
        %v1399 = vsel %vm706, %v1367, %v1351
        %v1400 = vsel %vm706, %v1368, %v1352
        %v1401 = vsel %vm706, %v1369, %v1353
        %v1402 = vsel %vm706, %v1370, %v1354
        %v1403 = vsel %vm706, %v1371, %v1355
        %v1404 = vsel %vm706, %v1372, %v1356
        %v1405 = vsel %vm706, %v1373, %v1357
        %v1406 = vsel %vm706, %v1374, %v1358
        %v1407 = vsel %vm706, %v1375, %v1359
        %v1408 = vsel %vm741, %v1312, -inf
        %v1409 = vsel %vm742, %v1328, -inf
        %v1410 = vsel %vm741, %v1313, -inf
        %v1411 = vsel %vm742, %v1329, -inf
        %v1412 = vsel %vm741, %v1314, -inf
        %v1413 = vsel %vm742, %v1330, -inf
        %v1414 = vsel %vm741, %v1315, -inf
        %v1415 = vsel %vm742, %v1331, -inf
        %v1416 = vsel %vm741, %v1316, -inf
        %v1417 = vsel %vm742, %v1332, -inf
        %v1418 = vsel %vm741, %v1317, -inf
        %v1419 = vsel %vm742, %v1333, -inf
        %v1420 = vsel %vm741, %v1318, -inf
        %v1421 = vsel %vm742, %v1334, -inf
        %v1422 = vsel %vm741, %v1319, -inf
        %v1423 = vsel %vm742, %v1335, -inf
        %v1424 = vsel %vm741, %v1320, -inf
        %v1425 = vsel %vm742, %v1336, -inf
        %v1426 = vsel %vm741, %v1321, -inf
        %v1427 = vsel %vm742, %v1337, -inf
        %v1428 = vsel %vm741, %v1322, -inf
        %v1429 = vsel %vm742, %v1338, -inf
        %v1430 = vsel %vm741, %v1323, -inf
        %v1431 = vsel %vm742, %v1339, -inf
        %v1432 = vsel %vm741, %v1324, -inf
        %v1433 = vsel %vm742, %v1340, -inf
        %v1434 = vsel %vm741, %v1325, -inf
        %v1435 = vsel %vm742, %v1341, -inf
        %v1436 = vsel %vm741, %v1326, -inf
        %v1437 = vsel %vm742, %v1342, -inf
        %v1438 = vsel %vm741, %v1327, -inf
        %v1439 = vsel %vm742, %v1343, -inf
        %v1440 = vsel %vm777, %v1392, -inf
        %v1441 = vsel %vm778, %v1376, -inf
        %v1442 = vsel %vm777, %v1393, -inf
        %v1443 = vsel %vm778, %v1377, -inf
        %v1444 = vsel %vm777, %v1394, -inf
        %v1445 = vsel %vm778, %v1378, -inf
        %v1446 = vsel %vm777, %v1395, -inf
        %v1447 = vsel %vm778, %v1379, -inf
        %v1448 = vsel %vm777, %v1396, -inf
        %v1449 = vsel %vm778, %v1380, -inf
        %v1450 = vsel %vm777, %v1397, -inf
        %v1451 = vsel %vm778, %v1381, -inf
        %v1452 = vsel %vm777, %v1398, -inf
        %v1453 = vsel %vm778, %v1382, -inf
        %v1454 = vsel %vm777, %v1399, -inf
        %v1455 = vsel %vm778, %v1383, -inf
        %v1456 = vsel %vm777, %v1400, -inf
        %v1457 = vsel %vm778, %v1384, -inf
        %v1458 = vsel %vm777, %v1401, -inf
        %v1459 = vsel %vm778, %v1385, -inf
        %v1460 = vsel %vm777, %v1402, -inf
        %v1461 = vsel %vm778, %v1386, -inf
        %v1462 = vsel %vm777, %v1403, -inf
        %v1463 = vsel %vm778, %v1387, -inf
        %v1464 = vsel %vm777, %v1404, -inf
        %v1465 = vsel %vm778, %v1388, -inf
        %v1466 = vsel %vm777, %v1405, -inf
        %v1467 = vsel %vm778, %v1389, -inf
        %v1468 = vsel %vm777, %v1406, -inf
        %v1469 = vsel %vm778, %v1390, -inf
        %v1470 = vsel %vm777, %v1407, -inf
        %v1471 = vsel %vm778, %v1391, -inf
        %v1472 = vmax.f32 %v1408, %v1440
        %v1473 = vmax.f32 %v1409, %v1441
        %v1474 = vmax.f32 %v1410, %v1442
        %v1475 = vmax.f32 %v1411, %v1443
        %v1476 = vmax.f32 %v1412, %v1444
        %v1477 = vmax.f32 %v1413, %v1445
        %v1478 = vmax.f32 %v1414, %v1446
        %v1479 = vmax.f32 %v1415, %v1447
        %v1480 = vmax.f32 %v1416, %v1448
        %v1481 = vmax.f32 %v1417, %v1449
        %v1482 = vmax.f32 %v1418, %v1450
        %v1483 = vmax.f32 %v1419, %v1451
        %v1484 = vmax.f32 %v1420, %v1452
        %v1485 = vmax.f32 %v1421, %v1453
        %v1486 = vmax.f32 %v1422, %v1454
        %v1487 = vmax.f32 %v1423, %v1455
        %v1488 = vmax.f32 %v1424, %v1456
        %v1489 = vmax.f32 %v1425, %v1457
        %v1490 = vmax.f32 %v1426, %v1458
        %v1491 = vmax.f32 %v1427, %v1459
        %v1492 = vmax.f32 %v1428, %v1460
        %v1493 = vmax.f32 %v1429, %v1461
        %v1494 = vmax.f32 %v1430, %v1462
        %v1495 = vmax.f32 %v1431, %v1463
        %v1496 = vmax.f32 %v1432, %v1464
        %v1497 = vmax.f32 %v1433, %v1465
        %v1498 = vmax.f32 %v1434, %v1466
        %v1499 = vmax.f32 %v1435, %v1467
        %v1500 = vmax.f32 %v1436, %v1468
        %v1501 = vmax.f32 %v1437, %v1469
        %v1502 = vmax.f32 %v1438, %v1470
        %v1503 = vmax.f32 %v1439, %v1471
        %v1504 = vmax.f32 %v1248, %v1472
        %v1505 = vmax.f32 %v1249, %v1473
        %v1506 = vmax.f32 %v1250, %v1474
        %v1507 = vmax.f32 %v1251, %v1475
        %v1508 = vmax.f32 %v1252, %v1476
        %v1509 = vmax.f32 %v1253, %v1477
        %v1510 = vmax.f32 %v1254, %v1478
        %v1511 = vmax.f32 %v1255, %v1479
        %v1512 = vmax.f32 %v1256, %v1480
        %v1513 = vmax.f32 %v1257, %v1481
        %v1514 = vmax.f32 %v1258, %v1482
        %v1515 = vmax.f32 %v1259, %v1483
        %v1516 = vmax.f32 %v1260, %v1484
        %v1517 = vmax.f32 %v1261, %v1485
        %v1518 = vmax.f32 %v1262, %v1486
        %v1519 = vmax.f32 %v1263, %v1487
        %v1520 = vmax.f32 %v1264, %v1488
        %v1521 = vmax.f32 %v1265, %v1489
        %v1522 = vmax.f32 %v1266, %v1490
        %v1523 = vmax.f32 %v1267, %v1491
        %v1524 = vmax.f32 %v1268, %v1492
        %v1525 = vmax.f32 %v1269, %v1493
        %v1526 = vmax.f32 %v1270, %v1494
        %v1527 = vmax.f32 %v1271, %v1495
        %v1528 = vmax.f32 %v1272, %v1496
        %v1529 = vmax.f32 %v1273, %v1497
        %v1530 = vmax.f32 %v1274, %v1498
        %v1531 = vmax.f32 %v1275, %v1499
        %v1532 = vmax.f32 %v1276, %v1500
        %v1533 = vmax.f32 %v1277, %v1501
        %v1534 = vmax.f32 %v1278, %v1502
        %v1535 = vmax.f32 %v1279, %v1503
        %s1536 = scalar_lea.vmem %s151, 512 [#allocation5]
        %1537 = vst [vmem:[%s1536] sm:$0xff] %v1504
        %1538 = vst [vmem:[%s1536 + $0x8] sm:$0xff] %v1505
        %1539 = vst [vmem:[%s1536 + $0x10] sm:$0xff] %v1506
        %1540 = vst [vmem:[%s1536 + $0x18] sm:$0xff] %v1507
        %1541 = vst [vmem:[%s1536 + $0x20] sm:$0xff] %v1508
        %1542 = vst [vmem:[%s1536 + $0x28] sm:$0xff] %v1509
        %1543 = vst [vmem:[%s1536 + $0x30] sm:$0xff] %v1510
        %1544 = vst [vmem:[%s1536 + $0x38] sm:$0xff] %v1511
        %1545 = vst [vmem:[%s1536 + $0x40] sm:$0xff] %v1512
        %1546 = vst [vmem:[%s1536 + $0x48] sm:$0xff] %v1513
        %1547 = vst [vmem:[%s1536 + $0x50] sm:$0xff] %v1514
        %1548 = vst [vmem:[%s1536 + $0x58] sm:$0xff] %v1515
        %1549 = vst [vmem:[%s1536 + $0x60] sm:$0xff] %v1516
        %1550 = vst [vmem:[%s1536 + $0x68] sm:$0xff] %v1517
        %1551 = vst [vmem:[%s1536 + $0x70] sm:$0xff] %v1518
        %1552 = vst [vmem:[%s1536 + $0x78] sm:$0xff] %v1519
        %1553 = vst [vmem:[%s1536 + $0x80] sm:$0xff] %v1520
        %1554 = vst [vmem:[%s1536 + $0x88] sm:$0xff] %v1521
        %1555 = vst [vmem:[%s1536 + $0x90] sm:$0xff] %v1522
        %1556 = vst [vmem:[%s1536 + $0x98] sm:$0xff] %v1523
        %1557 = vst [vmem:[%s1536 + $0xa0] sm:$0xff] %v1524
        %1558 = vst [vmem:[%s1536 + $0xa8] sm:$0xff] %v1525
        %1559 = vst [vmem:[%s1536 + $0xb0] sm:$0xff] %v1526
        %1560 = vst [vmem:[%s1536 + $0xb8] sm:$0xff] %v1527
        %1561 = vst [vmem:[%s1536 + $0xc0] sm:$0xff] %v1528
        %1562 = vst [vmem:[%s1536 + $0xc8] sm:$0xff] %v1529
        %1563 = vst [vmem:[%s1536 + $0xd0] sm:$0xff] %v1530
        %1564 = vst [vmem:[%s1536 + $0xd8] sm:$0xff] %v1531
        %1565 = vst [vmem:[%s1536 + $0xe0] sm:$0xff] %v1532
        %1566 = vst [vmem:[%s1536 + $0xe8] sm:$0xff] %v1533
        %1567 = vst [vmem:[%s1536 + $0xf0] sm:$0xff] %v1534
        %1568 = vst [vmem:[%s1536 + $0xf8] sm:$0xff] %v1535
        %v1569 = vmax.f32 %v1508, %v1504
        %v1570 = vmax.f32 %v1509, %v1505
        %v1571 = vmax.f32 %v1510, %v1506
        %v1572 = vmax.f32 %v1511, %v1507
        %v1573 = vmax.f32 %v1512, %v1508
        %v1574 = vmax.f32 %v1513, %v1509
        %v1575 = vmax.f32 %v1514, %v1510
        %v1576 = vmax.f32 %v1515, %v1511
        %v1577 = vmax.f32 %v1516, %v1512
        %v1578 = vmax.f32 %v1517, %v1513
        %v1579 = vmax.f32 %v1518, %v1514
        %v1580 = vmax.f32 %v1519, %v1515
        %v1581 = vmax.f32 %v1520, %v1516
        %v1582 = vmax.f32 %v1521, %v1517
        %v1583 = vmax.f32 %v1522, %v1518
        %v1584 = vmax.f32 %v1523, %v1519
        %v1585 = vmax.f32 %v1524, %v1520
        %v1586 = vmax.f32 %v1525, %v1521
        %v1587 = vmax.f32 %v1526, %v1522
        %v1588 = vmax.f32 %v1527, %v1523
        %v1589 = vmax.f32 %v1528, %v1524
        %v1590 = vmax.f32 %v1529, %v1525
        %v1591 = vmax.f32 %v1530, %v1526
        %v1592 = vmax.f32 %v1531, %v1527
        %v1593 = vmax.f32 %v1532, %v1528
        %v1594 = vmax.f32 %v1533, %v1529
        %v1595 = vmax.f32 %v1534, %v1530
        %v1596 = vmax.f32 %v1535, %v1531
        %v1597 = vmax.f32 %v1504, %v1506
        %v1598 = vmax.f32 %v1505, %v1507
        %v1599 = vmax.f32 %v1506, %v1569
        %v1600 = vmax.f32 %v1507, %v1570
        %v1601 = vmax.f32 %v1508, %v1571
        %v1602 = vmax.f32 %v1509, %v1572
        %v1603 = vmax.f32 %v1510, %v1573
        %v1604 = vmax.f32 %v1511, %v1574
        %v1605 = vmax.f32 %v1512, %v1575
        %v1606 = vmax.f32 %v1513, %v1576
        %v1607 = vmax.f32 %v1514, %v1577
        %v1608 = vmax.f32 %v1515, %v1578
        %v1609 = vmax.f32 %v1516, %v1579
        %v1610 = vmax.f32 %v1517, %v1580
        %v1611 = vmax.f32 %v1518, %v1581
        %v1612 = vmax.f32 %v1519, %v1582
        %v1613 = vmax.f32 %v1520, %v1583
        %v1614 = vmax.f32 %v1521, %v1584
        %v1615 = vmax.f32 %v1522, %v1585
        %v1616 = vmax.f32 %v1523, %v1586
        %v1617 = vmax.f32 %v1524, %v1587
        %v1618 = vmax.f32 %v1525, %v1588
        %v1619 = vmax.f32 %v1526, %v1589
        %v1620 = vmax.f32 %v1527, %v1590
        %v1621 = vmax.f32 %v1528, %v1591
        %v1622 = vmax.f32 %v1529, %v1592
        %v1623 = vmax.f32 %v1530, %v1593
        %v1624 = vmax.f32 %v1531, %v1594
        %v1625 = vmax.f32 %v1532, %v1595
        %v1626 = vmax.f32 %v1533, %v1596
        %v1627 = vmax.f32 %v1534, %v1532
        %v1628 = vmax.f32 %v1535, %v1533
        %v1629 = vmax.f32 %v1512, %v1504
        %v1630 = vmax.f32 %v1513, %v1505
        %v1631 = vmax.f32 %v1514, %v1506
        %v1632 = vmax.f32 %v1515, %v1507
        %v1633 = vmax.f32 %v1516, %v1508
        %v1634 = vmax.f32 %v1517, %v1509
        %v1635 = vmax.f32 %v1518, %v1510
        %v1636 = vmax.f32 %v1519, %v1511
        %v1637 = vmax.f32 %v1520, %v1512
        %v1638 = vmax.f32 %v1521, %v1513
        %v1639 = vmax.f32 %v1522, %v1514
        %v1640 = vmax.f32 %v1523, %v1515
        %v1641 = vmax.f32 %v1524, %v1516
        %v1642 = vmax.f32 %v1525, %v1517
        %v1643 = vmax.f32 %v1526, %v1518
        %v1644 = vmax.f32 %v1527, %v1519
        %v1645 = vmax.f32 %v1528, %v1520
        %v1646 = vmax.f32 %v1529, %v1521
        %v1647 = vmax.f32 %v1530, %v1522
        %v1648 = vmax.f32 %v1531, %v1523
        %v1649 = vmax.f32 %v1532, %v1524
        %v1650 = vmax.f32 %v1533, %v1525
        %v1651 = vmax.f32 %v1534, %v1526
        %v1652 = vmax.f32 %v1535, %v1527
        %v1653 = vmax.f32 %v1597, %v1508
        %v1654 = vmax.f32 %v1598, %v1509
        %v1655 = vmax.f32 %v1599, %v1510
        %v1656 = vmax.f32 %v1600, %v1511
        %v1657 = vmax.f32 %v1601, %v1629
        %v1658 = vmax.f32 %v1602, %v1630
        %v1659 = vmax.f32 %v1603, %v1631
        %v1660 = vmax.f32 %v1604, %v1632
        %v1661 = vmax.f32 %v1605, %v1633
        %v1662 = vmax.f32 %v1606, %v1634
        %v1663 = vmax.f32 %v1607, %v1635
        %v1664 = vmax.f32 %v1608, %v1636
        %v1665 = vmax.f32 %v1609, %v1637
        %v1666 = vmax.f32 %v1610, %v1638
        %v1667 = vmax.f32 %v1611, %v1639
        %v1668 = vmax.f32 %v1612, %v1640
        %v1669 = vmax.f32 %v1613, %v1641
        %v1670 = vmax.f32 %v1614, %v1642
        %v1671 = vmax.f32 %v1615, %v1643
        %v1672 = vmax.f32 %v1616, %v1644
        %v1673 = vmax.f32 %v1617, %v1645
        %v1674 = vmax.f32 %v1618, %v1646
        %v1675 = vmax.f32 %v1619, %v1647
        %v1676 = vmax.f32 %v1620, %v1648
        %v1677 = vmax.f32 %v1621, %v1649
        %v1678 = vmax.f32 %v1622, %v1650
        %v1679 = vmax.f32 %v1623, %v1651
        %v1680 = vmax.f32 %v1624, %v1652
        %v1681 = vmax.f32 %v1625, %v1528
        %v1682 = vmax.f32 %v1626, %v1529
        %v1683 = vmax.f32 %v1627, %v1530
        %v1684 = vmax.f32 %v1628, %v1531
        %v1685 = vrot.slane %v1653, 1
        %v1686 = vrot.slane %v1655, 1
        %v1687 = vrot.slane %v1657, 1
        %v1688 = vrot.slane %v1659, 1
        %v1689 = vrot.slane %v1661, 1
        %v1690 = vrot.slane %v1663, 1
        %v1691 = vrot.slane %v1665, 1
        %v1692 = vrot.slane %v1667, 1
        %v1693 = vrot.slane %v1669, 1
        %v1694 = vrot.slane %v1671, 1
        %v1695 = vrot.slane %v1673, 1
        %v1696 = vrot.slane %v1675, 1
        %v1697 = vrot.slane %v1677, 1
        %v1698 = vrot.slane %v1679, 1
        %v1699 = vrot.slane %v1681, 1
        %v1700 = vrot.slane %v1683, 1
        %v1701 = vrot.slane %v1654, 1
        %v1702 = vrot.slane %v1656, 1
        %v1703 = vrot.slane %v1658, 1
        %v1704 = vrot.slane %v1660, 1
        %v1705 = vrot.slane %v1662, 1
        %v1706 = vrot.slane %v1664, 1
        %v1707 = vrot.slane %v1666, 1
        %v1708 = vrot.slane %v1668, 1
        %v1709 = vrot.slane %v1670, 1
        %v1710 = vrot.slane %v1672, 1
        %v1711 = vrot.slane %v1674, 1
        %v1712 = vrot.slane %v1676, 1
        %v1713 = vrot.slane %v1678, 1
        %v1714 = vrot.slane %v1680, 1
        %v1715 = vrot.slane %v1682, 1
        %v1716 = vrot.slane %v1684, 1
        %v1717 = vsel %vm375, %v1685, %v1701
        %v1718 = vsel %vm375, %v1686, %v1702
        %v1719 = vsel %vm375, %v1687, %v1703
        %v1720 = vsel %vm375, %v1688, %v1704
        %v1721 = vsel %vm375, %v1689, %v1705
        %v1722 = vsel %vm375, %v1690, %v1706
        %v1723 = vsel %vm375, %v1691, %v1707
        %v1724 = vsel %vm375, %v1692, %v1708
        %v1725 = vsel %vm375, %v1693, %v1709
        %v1726 = vsel %vm375, %v1694, %v1710
        %v1727 = vsel %vm375, %v1695, %v1711
        %v1728 = vsel %vm375, %v1696, %v1712
        %v1729 = vsel %vm375, %v1697, %v1713
        %v1730 = vsel %vm375, %v1698, %v1714
        %v1731 = vsel %vm375, %v1699, %v1715
        %v1732 = vsel %vm375, %v1700, %v1716
        %v1733 = vsel %vm375, %v1701, %v1685
        %v1734 = vsel %vm375, %v1702, %v1686
        %v1735 = vsel %vm375, %v1703, %v1687
        %v1736 = vsel %vm375, %v1704, %v1688
        %v1737 = vsel %vm375, %v1705, %v1689
        %v1738 = vsel %vm375, %v1706, %v1690
        %v1739 = vsel %vm375, %v1707, %v1691
        %v1740 = vsel %vm375, %v1708, %v1692
        %v1741 = vsel %vm375, %v1709, %v1693
        %v1742 = vsel %vm375, %v1710, %v1694
        %v1743 = vsel %vm375, %v1711, %v1695
        %v1744 = vsel %vm375, %v1712, %v1696
        %v1745 = vsel %vm375, %v1713, %v1697
        %v1746 = vsel %vm375, %v1714, %v1698
        %v1747 = vsel %vm375, %v1715, %v1699
        %v1748 = vsel %vm375, %v1716, %v1700
        %v1749 = vrot.slane %v1653, 7
        %v1750 = vrot.slane %v1655, 7
        %v1751 = vrot.slane %v1657, 7
        %v1752 = vrot.slane %v1659, 7
        %v1753 = vrot.slane %v1661, 7
        %v1754 = vrot.slane %v1663, 7
        %v1755 = vrot.slane %v1665, 7
        %v1756 = vrot.slane %v1667, 7
        %v1757 = vrot.slane %v1669, 7
        %v1758 = vrot.slane %v1671, 7
        %v1759 = vrot.slane %v1673, 7
        %v1760 = vrot.slane %v1675, 7
        %v1761 = vrot.slane %v1677, 7
        %v1762 = vrot.slane %v1679, 7
        %v1763 = vrot.slane %v1681, 7
        %v1764 = vrot.slane %v1683, 7
        %v1765 = vrot.slane %v1654, 7
        %v1766 = vrot.slane %v1656, 7
        %v1767 = vrot.slane %v1658, 7
        %v1768 = vrot.slane %v1660, 7
        %v1769 = vrot.slane %v1662, 7
        %v1770 = vrot.slane %v1664, 7
        %v1771 = vrot.slane %v1666, 7
        %v1772 = vrot.slane %v1668, 7
        %v1773 = vrot.slane %v1670, 7
        %v1774 = vrot.slane %v1672, 7
        %v1775 = vrot.slane %v1674, 7
        %v1776 = vrot.slane %v1676, 7
        %v1777 = vrot.slane %v1678, 7
        %v1778 = vrot.slane %v1680, 7
        %v1779 = vrot.slane %v1682, 7
        %v1780 = vrot.slane %v1684, 7
        %v1781 = vsel %vm440, %v1749, %v1765
        %v1782 = vsel %vm440, %v1750, %v1766
        %v1783 = vsel %vm440, %v1751, %v1767
        %v1784 = vsel %vm440, %v1752, %v1768
        %v1785 = vsel %vm440, %v1753, %v1769
        %v1786 = vsel %vm440, %v1754, %v1770
        %v1787 = vsel %vm440, %v1755, %v1771
        %v1788 = vsel %vm440, %v1756, %v1772
        %v1789 = vsel %vm440, %v1757, %v1773
        %v1790 = vsel %vm440, %v1758, %v1774
        %v1791 = vsel %vm440, %v1759, %v1775
        %v1792 = vsel %vm440, %v1760, %v1776
        %v1793 = vsel %vm440, %v1761, %v1777
        %v1794 = vsel %vm440, %v1762, %v1778
        %v1795 = vsel %vm440, %v1763, %v1779
        %v1796 = vsel %vm440, %v1764, %v1780
        %v1797 = vsel %vm440, %v1765, %v1749
        %v1798 = vsel %vm440, %v1766, %v1750
        %v1799 = vsel %vm440, %v1767, %v1751
        %v1800 = vsel %vm440, %v1768, %v1752
        %v1801 = vsel %vm440, %v1769, %v1753
        %v1802 = vsel %vm440, %v1770, %v1754
        %v1803 = vsel %vm440, %v1771, %v1755
        %v1804 = vsel %vm440, %v1772, %v1756
        %v1805 = vsel %vm440, %v1773, %v1757
        %v1806 = vsel %vm440, %v1774, %v1758
        %v1807 = vsel %vm440, %v1775, %v1759
        %v1808 = vsel %vm440, %v1776, %v1760
        %v1809 = vsel %vm440, %v1777, %v1761
        %v1810 = vsel %vm440, %v1778, %v1762
        %v1811 = vsel %vm440, %v1779, %v1763
        %v1812 = vsel %vm440, %v1780, %v1764
        %v1813 = vsel %vm475, %v1717, -inf
        %v1814 = vsel %vm476, %v1733, -inf
        %v1815 = vsel %vm475, %v1718, -inf
        %v1816 = vsel %vm476, %v1734, -inf
        %v1817 = vsel %vm475, %v1719, -inf
        %v1818 = vsel %vm476, %v1735, -inf
        %v1819 = vsel %vm475, %v1720, -inf
        %v1820 = vsel %vm476, %v1736, -inf
        %v1821 = vsel %vm475, %v1721, -inf
        %v1822 = vsel %vm476, %v1737, -inf
        %v1823 = vsel %vm475, %v1722, -inf
        %v1824 = vsel %vm476, %v1738, -inf
        %v1825 = vsel %vm475, %v1723, -inf
        %v1826 = vsel %vm476, %v1739, -inf
        %v1827 = vsel %vm475, %v1724, -inf
        %v1828 = vsel %vm476, %v1740, -inf
        %v1829 = vsel %vm475, %v1725, -inf
        %v1830 = vsel %vm476, %v1741, -inf
        %v1831 = vsel %vm475, %v1726, -inf
        %v1832 = vsel %vm476, %v1742, -inf
        %v1833 = vsel %vm475, %v1727, -inf
        %v1834 = vsel %vm476, %v1743, -inf
        %v1835 = vsel %vm475, %v1728, -inf
        %v1836 = vsel %vm476, %v1744, -inf
        %v1837 = vsel %vm475, %v1729, -inf
        %v1838 = vsel %vm476, %v1745, -inf
        %v1839 = vsel %vm475, %v1730, -inf
        %v1840 = vsel %vm476, %v1746, -inf
        %v1841 = vsel %vm475, %v1731, -inf
        %v1842 = vsel %vm476, %v1747, -inf
        %v1843 = vsel %vm475, %v1732, -inf
        %v1844 = vsel %vm476, %v1748, -inf
        %v1845 = vsel %vm511, %v1797, -inf
        %v1846 = vsel %vm512, %v1781, -inf
        %v1847 = vsel %vm511, %v1798, -inf
        %v1848 = vsel %vm512, %v1782, -inf
        %v1849 = vsel %vm511, %v1799, -inf
        %v1850 = vsel %vm512, %v1783, -inf
        %v1851 = vsel %vm511, %v1800, -inf
        %v1852 = vsel %vm512, %v1784, -inf
        %v1853 = vsel %vm511, %v1801, -inf
        %v1854 = vsel %vm512, %v1785, -inf
        %v1855 = vsel %vm511, %v1802, -inf
        %v1856 = vsel %vm512, %v1786, -inf
        %v1857 = vsel %vm511, %v1803, -inf
        %v1858 = vsel %vm512, %v1787, -inf
        %v1859 = vsel %vm511, %v1804, -inf
        %v1860 = vsel %vm512, %v1788, -inf
        %v1861 = vsel %vm511, %v1805, -inf
        %v1862 = vsel %vm512, %v1789, -inf
        %v1863 = vsel %vm511, %v1806, -inf
        %v1864 = vsel %vm512, %v1790, -inf
        %v1865 = vsel %vm511, %v1807, -inf
        %v1866 = vsel %vm512, %v1791, -inf
        %v1867 = vsel %vm511, %v1808, -inf
        %v1868 = vsel %vm512, %v1792, -inf
        %v1869 = vsel %vm511, %v1809, -inf
        %v1870 = vsel %vm512, %v1793, -inf
        %v1871 = vsel %vm511, %v1810, -inf
        %v1872 = vsel %vm512, %v1794, -inf
        %v1873 = vsel %vm511, %v1811, -inf
        %v1874 = vsel %vm512, %v1795, -inf
        %v1875 = vsel %vm511, %v1812, -inf
        %v1876 = vsel %vm512, %v1796, -inf
        %v1877 = vmax.f32 %v1813, %v1845
        %v1878 = vmax.f32 %v1814, %v1846
        %v1879 = vmax.f32 %v1815, %v1847
        %v1880 = vmax.f32 %v1816, %v1848
        %v1881 = vmax.f32 %v1817, %v1849
        %v1882 = vmax.f32 %v1818, %v1850
        %v1883 = vmax.f32 %v1819, %v1851
        %v1884 = vmax.f32 %v1820, %v1852
        %v1885 = vmax.f32 %v1821, %v1853
        %v1886 = vmax.f32 %v1822, %v1854
        %v1887 = vmax.f32 %v1823, %v1855
        %v1888 = vmax.f32 %v1824, %v1856
        %v1889 = vmax.f32 %v1825, %v1857
        %v1890 = vmax.f32 %v1826, %v1858
        %v1891 = vmax.f32 %v1827, %v1859
        %v1892 = vmax.f32 %v1828, %v1860
        %v1893 = vmax.f32 %v1829, %v1861
        %v1894 = vmax.f32 %v1830, %v1862
        %v1895 = vmax.f32 %v1831, %v1863
        %v1896 = vmax.f32 %v1832, %v1864
        %v1897 = vmax.f32 %v1833, %v1865
        %v1898 = vmax.f32 %v1834, %v1866
        %v1899 = vmax.f32 %v1835, %v1867
        %v1900 = vmax.f32 %v1836, %v1868
        %v1901 = vmax.f32 %v1837, %v1869
        %v1902 = vmax.f32 %v1838, %v1870
        %v1903 = vmax.f32 %v1839, %v1871
        %v1904 = vmax.f32 %v1840, %v1872
        %v1905 = vmax.f32 %v1841, %v1873
        %v1906 = vmax.f32 %v1842, %v1874
        %v1907 = vmax.f32 %v1843, %v1875
        %v1908 = vmax.f32 %v1844, %v1876
        %v1909 = vmax.f32 %v1653, %v1877
        %v1910 = vmax.f32 %v1654, %v1878
        %v1911 = vmax.f32 %v1655, %v1879
        %v1912 = vmax.f32 %v1656, %v1880
        %v1913 = vmax.f32 %v1657, %v1881
        %v1914 = vmax.f32 %v1658, %v1882
        %v1915 = vmax.f32 %v1659, %v1883
        %v1916 = vmax.f32 %v1660, %v1884
        %v1917 = vmax.f32 %v1661, %v1885
        %v1918 = vmax.f32 %v1662, %v1886
        %v1919 = vmax.f32 %v1663, %v1887
        %v1920 = vmax.f32 %v1664, %v1888
        %v1921 = vmax.f32 %v1665, %v1889
        %v1922 = vmax.f32 %v1666, %v1890
        %v1923 = vmax.f32 %v1667, %v1891
        %v1924 = vmax.f32 %v1668, %v1892
        %v1925 = vmax.f32 %v1669, %v1893
        %v1926 = vmax.f32 %v1670, %v1894
        %v1927 = vmax.f32 %v1671, %v1895
        %v1928 = vmax.f32 %v1672, %v1896
        %v1929 = vmax.f32 %v1673, %v1897
        %v1930 = vmax.f32 %v1674, %v1898
        %v1931 = vmax.f32 %v1675, %v1899
        %v1932 = vmax.f32 %v1676, %v1900
        %v1933 = vmax.f32 %v1677, %v1901
        %v1934 = vmax.f32 %v1678, %v1902
        %v1935 = vmax.f32 %v1679, %v1903
        %v1936 = vmax.f32 %v1680, %v1904
        %v1937 = vmax.f32 %v1681, %v1905
        %v1938 = vmax.f32 %v1682, %v1906
        %v1939 = vmax.f32 %v1683, %v1907
        %v1940 = vmax.f32 %v1684, %v1908
        %v1941 = vrot.slane %v1653, 2
        %v1942 = vrot.slane %v1655, 2
        %v1943 = vrot.slane %v1657, 2
        %v1944 = vrot.slane %v1659, 2
        %v1945 = vrot.slane %v1661, 2
        %v1946 = vrot.slane %v1663, 2
        %v1947 = vrot.slane %v1665, 2
        %v1948 = vrot.slane %v1667, 2
        %v1949 = vrot.slane %v1669, 2
        %v1950 = vrot.slane %v1671, 2
        %v1951 = vrot.slane %v1673, 2
        %v1952 = vrot.slane %v1675, 2
        %v1953 = vrot.slane %v1677, 2
        %v1954 = vrot.slane %v1679, 2
        %v1955 = vrot.slane %v1681, 2
        %v1956 = vrot.slane %v1683, 2
        %v1957 = vrot.slane %v1654, 2
        %v1958 = vrot.slane %v1656, 2
        %v1959 = vrot.slane %v1658, 2
        %v1960 = vrot.slane %v1660, 2
        %v1961 = vrot.slane %v1662, 2
        %v1962 = vrot.slane %v1664, 2
        %v1963 = vrot.slane %v1666, 2
        %v1964 = vrot.slane %v1668, 2
        %v1965 = vrot.slane %v1670, 2
        %v1966 = vrot.slane %v1672, 2
        %v1967 = vrot.slane %v1674, 2
        %v1968 = vrot.slane %v1676, 2
        %v1969 = vrot.slane %v1678, 2
        %v1970 = vrot.slane %v1680, 2
        %v1971 = vrot.slane %v1682, 2
        %v1972 = vrot.slane %v1684, 2
        %v1973 = vsel %vm641, %v1941, %v1957
        %v1974 = vsel %vm641, %v1942, %v1958
        %v1975 = vsel %vm641, %v1943, %v1959
        %v1976 = vsel %vm641, %v1944, %v1960
        %v1977 = vsel %vm641, %v1945, %v1961
        %v1978 = vsel %vm641, %v1946, %v1962
        %v1979 = vsel %vm641, %v1947, %v1963
        %v1980 = vsel %vm641, %v1948, %v1964
        %v1981 = vsel %vm641, %v1949, %v1965
        %v1982 = vsel %vm641, %v1950, %v1966
        %v1983 = vsel %vm641, %v1951, %v1967
        %v1984 = vsel %vm641, %v1952, %v1968
        %v1985 = vsel %vm641, %v1953, %v1969
        %v1986 = vsel %vm641, %v1954, %v1970
        %v1987 = vsel %vm641, %v1955, %v1971
        %v1988 = vsel %vm641, %v1956, %v1972
        %v1989 = vsel %vm641, %v1957, %v1941
        %v1990 = vsel %vm641, %v1958, %v1942
        %v1991 = vsel %vm641, %v1959, %v1943
        %v1992 = vsel %vm641, %v1960, %v1944
        %v1993 = vsel %vm641, %v1961, %v1945
        %v1994 = vsel %vm641, %v1962, %v1946
        %v1995 = vsel %vm641, %v1963, %v1947
        %v1996 = vsel %vm641, %v1964, %v1948
        %v1997 = vsel %vm641, %v1965, %v1949
        %v1998 = vsel %vm641, %v1966, %v1950
        %v1999 = vsel %vm641, %v1967, %v1951
        %v2000 = vsel %vm641, %v1968, %v1952
        %v2001 = vsel %vm641, %v1969, %v1953
        %v2002 = vsel %vm641, %v1970, %v1954
        %v2003 = vsel %vm641, %v1971, %v1955
        %v2004 = vsel %vm641, %v1972, %v1956
        %v2005 = vrot.slane %v1653, 6
        %v2006 = vrot.slane %v1655, 6
        %v2007 = vrot.slane %v1657, 6
        %v2008 = vrot.slane %v1659, 6
        %v2009 = vrot.slane %v1661, 6
        %v2010 = vrot.slane %v1663, 6
        %v2011 = vrot.slane %v1665, 6
        %v2012 = vrot.slane %v1667, 6
        %v2013 = vrot.slane %v1669, 6
        %v2014 = vrot.slane %v1671, 6
        %v2015 = vrot.slane %v1673, 6
        %v2016 = vrot.slane %v1675, 6
        %v2017 = vrot.slane %v1677, 6
        %v2018 = vrot.slane %v1679, 6
        %v2019 = vrot.slane %v1681, 6
        %v2020 = vrot.slane %v1683, 6
        %v2021 = vrot.slane %v1654, 6
        %v2022 = vrot.slane %v1656, 6
        %v2023 = vrot.slane %v1658, 6
        %v2024 = vrot.slane %v1660, 6
        %v2025 = vrot.slane %v1662, 6
        %v2026 = vrot.slane %v1664, 6
        %v2027 = vrot.slane %v1666, 6
        %v2028 = vrot.slane %v1668, 6
        %v2029 = vrot.slane %v1670, 6
        %v2030 = vrot.slane %v1672, 6
        %v2031 = vrot.slane %v1674, 6
        %v2032 = vrot.slane %v1676, 6
        %v2033 = vrot.slane %v1678, 6
        %v2034 = vrot.slane %v1680, 6
        %v2035 = vrot.slane %v1682, 6
        %v2036 = vrot.slane %v1684, 6
        %v2037 = vsel %vm706, %v2005, %v2021
        %v2038 = vsel %vm706, %v2006, %v2022
        %v2039 = vsel %vm706, %v2007, %v2023
        %v2040 = vsel %vm706, %v2008, %v2024
        %v2041 = vsel %vm706, %v2009, %v2025
        %v2042 = vsel %vm706, %v2010, %v2026
        %v2043 = vsel %vm706, %v2011, %v2027
        %v2044 = vsel %vm706, %v2012, %v2028
        %v2045 = vsel %vm706, %v2013, %v2029
        %v2046 = vsel %vm706, %v2014, %v2030
        %v2047 = vsel %vm706, %v2015, %v2031
        %v2048 = vsel %vm706, %v2016, %v2032
        %v2049 = vsel %vm706, %v2017, %v2033
        %v2050 = vsel %vm706, %v2018, %v2034
        %v2051 = vsel %vm706, %v2019, %v2035
        %v2052 = vsel %vm706, %v2020, %v2036
        %v2053 = vsel %vm706, %v2021, %v2005
        %v2054 = vsel %vm706, %v2022, %v2006
        %v2055 = vsel %vm706, %v2023, %v2007
        %v2056 = vsel %vm706, %v2024, %v2008
        %v2057 = vsel %vm706, %v2025, %v2009
        %v2058 = vsel %vm706, %v2026, %v2010
        %v2059 = vsel %vm706, %v2027, %v2011
        %v2060 = vsel %vm706, %v2028, %v2012
        %v2061 = vsel %vm706, %v2029, %v2013
        %v2062 = vsel %vm706, %v2030, %v2014
        %v2063 = vsel %vm706, %v2031, %v2015
        %v2064 = vsel %vm706, %v2032, %v2016
        %v2065 = vsel %vm706, %v2033, %v2017
        %v2066 = vsel %vm706, %v2034, %v2018
        %v2067 = vsel %vm706, %v2035, %v2019
        %v2068 = vsel %vm706, %v2036, %v2020
        %v2069 = vsel %vm741, %v1973, -inf
        %v2070 = vsel %vm742, %v1989, -inf
        %v2071 = vsel %vm741, %v1974, -inf
        %v2072 = vsel %vm742, %v1990, -inf
        %v2073 = vsel %vm741, %v1975, -inf
        %v2074 = vsel %vm742, %v1991, -inf
        %v2075 = vsel %vm741, %v1976, -inf
        %v2076 = vsel %vm742, %v1992, -inf
        %v2077 = vsel %vm741, %v1977, -inf
        %v2078 = vsel %vm742, %v1993, -inf
        %v2079 = vsel %vm741, %v1978, -inf
        %v2080 = vsel %vm742, %v1994, -inf
        %v2081 = vsel %vm741, %v1979, -inf
        %v2082 = vsel %vm742, %v1995, -inf
        %v2083 = vsel %vm741, %v1980, -inf
        %v2084 = vsel %vm742, %v1996, -inf
        %v2085 = vsel %vm741, %v1981, -inf
        %v2086 = vsel %vm742, %v1997, -inf
        %v2087 = vsel %vm741, %v1982, -inf
        %v2088 = vsel %vm742, %v1998, -inf
        %v2089 = vsel %vm741, %v1983, -inf
        %v2090 = vsel %vm742, %v1999, -inf
        %v2091 = vsel %vm741, %v1984, -inf
        %v2092 = vsel %vm742, %v2000, -inf
        %v2093 = vsel %vm741, %v1985, -inf
        %v2094 = vsel %vm742, %v2001, -inf
        %v2095 = vsel %vm741, %v1986, -inf
        %v2096 = vsel %vm742, %v2002, -inf
        %v2097 = vsel %vm741, %v1987, -inf
        %v2098 = vsel %vm742, %v2003, -inf
        %v2099 = vsel %vm741, %v1988, -inf
        %v2100 = vsel %vm742, %v2004, -inf
        %v2101 = vsel %vm777, %v2053, -inf
        %v2102 = vsel %vm778, %v2037, -inf
        %v2103 = vsel %vm777, %v2054, -inf
        %v2104 = vsel %vm778, %v2038, -inf
        %v2105 = vsel %vm777, %v2055, -inf
        %v2106 = vsel %vm778, %v2039, -inf
        %v2107 = vsel %vm777, %v2056, -inf
        %v2108 = vsel %vm778, %v2040, -inf
        %v2109 = vsel %vm777, %v2057, -inf
        %v2110 = vsel %vm778, %v2041, -inf
        %v2111 = vsel %vm777, %v2058, -inf
        %v2112 = vsel %vm778, %v2042, -inf
        %v2113 = vsel %vm777, %v2059, -inf
        %v2114 = vsel %vm778, %v2043, -inf
        %v2115 = vsel %vm777, %v2060, -inf
        %v2116 = vsel %vm778, %v2044, -inf
        %v2117 = vsel %vm777, %v2061, -inf
        %v2118 = vsel %vm778, %v2045, -inf
        %v2119 = vsel %vm777, %v2062, -inf
        %v2120 = vsel %vm778, %v2046, -inf
        %v2121 = vsel %vm777, %v2063, -inf
        %v2122 = vsel %vm778, %v2047, -inf
        %v2123 = vsel %vm777, %v2064, -inf
        %v2124 = vsel %vm778, %v2048, -inf
        %v2125 = vsel %vm777, %v2065, -inf
        %v2126 = vsel %vm778, %v2049, -inf
        %v2127 = vsel %vm777, %v2066, -inf
        %v2128 = vsel %vm778, %v2050, -inf
        %v2129 = vsel %vm777, %v2067, -inf
        %v2130 = vsel %vm778, %v2051, -inf
        %v2131 = vsel %vm777, %v2068, -inf
        %v2132 = vsel %vm778, %v2052, -inf
        %v2133 = vmax.f32 %v2069, %v2101
        %v2134 = vmax.f32 %v2070, %v2102
        %v2135 = vmax.f32 %v2071, %v2103
        %v2136 = vmax.f32 %v2072, %v2104
        %v2137 = vmax.f32 %v2073, %v2105
        %v2138 = vmax.f32 %v2074, %v2106
        %v2139 = vmax.f32 %v2075, %v2107
        %v2140 = vmax.f32 %v2076, %v2108
        %v2141 = vmax.f32 %v2077, %v2109
        %v2142 = vmax.f32 %v2078, %v2110
        %v2143 = vmax.f32 %v2079, %v2111
        %v2144 = vmax.f32 %v2080, %v2112
        %v2145 = vmax.f32 %v2081, %v2113
        %v2146 = vmax.f32 %v2082, %v2114
        %v2147 = vmax.f32 %v2083, %v2115
        %v2148 = vmax.f32 %v2084, %v2116
        %v2149 = vmax.f32 %v2085, %v2117
        %v2150 = vmax.f32 %v2086, %v2118
        %v2151 = vmax.f32 %v2087, %v2119
        %v2152 = vmax.f32 %v2088, %v2120
        %v2153 = vmax.f32 %v2089, %v2121
        %v2154 = vmax.f32 %v2090, %v2122
        %v2155 = vmax.f32 %v2091, %v2123
        %v2156 = vmax.f32 %v2092, %v2124
        %v2157 = vmax.f32 %v2093, %v2125
        %v2158 = vmax.f32 %v2094, %v2126
        %v2159 = vmax.f32 %v2095, %v2127
        %v2160 = vmax.f32 %v2096, %v2128
        %v2161 = vmax.f32 %v2097, %v2129
        %v2162 = vmax.f32 %v2098, %v2130
        %v2163 = vmax.f32 %v2099, %v2131
        %v2164 = vmax.f32 %v2100, %v2132
        %v2165 = vmax.f32 %v1909, %v2133
        %v2166 = vmax.f32 %v1910, %v2134
        %v2167 = vmax.f32 %v1911, %v2135
        %v2168 = vmax.f32 %v1912, %v2136
        %v2169 = vmax.f32 %v1913, %v2137
        %v2170 = vmax.f32 %v1914, %v2138
        %v2171 = vmax.f32 %v1915, %v2139
        %v2172 = vmax.f32 %v1916, %v2140
        %v2173 = vmax.f32 %v1917, %v2141
        %v2174 = vmax.f32 %v1918, %v2142
        %v2175 = vmax.f32 %v1919, %v2143
        %v2176 = vmax.f32 %v1920, %v2144
        %v2177 = vmax.f32 %v1921, %v2145
        %v2178 = vmax.f32 %v1922, %v2146
        %v2179 = vmax.f32 %v1923, %v2147
        %v2180 = vmax.f32 %v1924, %v2148
        %v2181 = vmax.f32 %v1925, %v2149
        %v2182 = vmax.f32 %v1926, %v2150
        %v2183 = vmax.f32 %v1927, %v2151
        %v2184 = vmax.f32 %v1928, %v2152
        %v2185 = vmax.f32 %v1929, %v2153
        %v2186 = vmax.f32 %v1930, %v2154
        %v2187 = vmax.f32 %v1931, %v2155
        %v2188 = vmax.f32 %v1932, %v2156
        %v2189 = vmax.f32 %v1933, %v2157
        %v2190 = vmax.f32 %v1934, %v2158
        %v2191 = vmax.f32 %v1935, %v2159
        %v2192 = vmax.f32 %v1936, %v2160
        %v2193 = vmax.f32 %v1937, %v2161
        %v2194 = vmax.f32 %v1938, %v2162
        %v2195 = vmax.f32 %v1939, %v2163
        %v2196 = vmax.f32 %v1940, %v2164
        %s2197 = scalar_lea.vmem %s151, 768 [#allocation5]
        %2198 = vst [vmem:[%s2197] sm:$0xff] %v2165
        %2199 = vst [vmem:[%s2197 + $0x8] sm:$0xff] %v2166
        %2200 = vst [vmem:[%s2197 + $0x10] sm:$0xff] %v2167
        %2201 = vst [vmem:[%s2197 + $0x18] sm:$0xff] %v2168
        %2202 = vst [vmem:[%s2197 + $0x20] sm:$0xff] %v2169
        %2203 = vst [vmem:[%s2197 + $0x28] sm:$0xff] %v2170
        %2204 = vst [vmem:[%s2197 + $0x30] sm:$0xff] %v2171
        %2205 = vst [vmem:[%s2197 + $0x38] sm:$0xff] %v2172
        %2206 = vst [vmem:[%s2197 + $0x40] sm:$0xff] %v2173
        %2207 = vst [vmem:[%s2197 + $0x48] sm:$0xff] %v2174
        %2208 = vst [vmem:[%s2197 + $0x50] sm:$0xff] %v2175
        %2209 = vst [vmem:[%s2197 + $0x58] sm:$0xff] %v2176
        %2210 = vst [vmem:[%s2197 + $0x60] sm:$0xff] %v2177
        %2211 = vst [vmem:[%s2197 + $0x68] sm:$0xff] %v2178
        %2212 = vst [vmem:[%s2197 + $0x70] sm:$0xff] %v2179
        %2213 = vst [vmem:[%s2197 + $0x78] sm:$0xff] %v2180
        %2214 = vst [vmem:[%s2197 + $0x80] sm:$0xff] %v2181
        %2215 = vst [vmem:[%s2197 + $0x88] sm:$0xff] %v2182
        %2216 = vst [vmem:[%s2197 + $0x90] sm:$0xff] %v2183
        %2217 = vst [vmem:[%s2197 + $0x98] sm:$0xff] %v2184
        %2218 = vst [vmem:[%s2197 + $0xa0] sm:$0xff] %v2185
        %2219 = vst [vmem:[%s2197 + $0xa8] sm:$0xff] %v2186
        %2220 = vst [vmem:[%s2197 + $0xb0] sm:$0xff] %v2187
        %2221 = vst [vmem:[%s2197 + $0xb8] sm:$0xff] %v2188
        %2222 = vst [vmem:[%s2197 + $0xc0] sm:$0xff] %v2189
        %2223 = vst [vmem:[%s2197 + $0xc8] sm:$0xff] %v2190
        %2224 = vst [vmem:[%s2197 + $0xd0] sm:$0xff] %v2191
        %2225 = vst [vmem:[%s2197 + $0xd8] sm:$0xff] %v2192
        %2226 = vst [vmem:[%s2197 + $0xe0] sm:$0xff] %v2193
        %2227 = vst [vmem:[%s2197 + $0xe8] sm:$0xff] %v2194
        %2228 = vst [vmem:[%s2197 + $0xf0] sm:$0xff] %v2195
        %2229 = vst [vmem:[%s2197 + $0xf8] sm:$0xff] %v2196
        %s2230 = sand.u32 %s68, 1
        %s2231 = scalar_lea.sflag [#allocation4], %s2230
        %s2232 = sand.u32 %s68, 1
        %s2233 = smul.addr %s2232, 1024
        %s2234 = scalar_lea.vmem [#allocation5], %s2233
        // Predicated region
        $region29: #{tpu_custom_call.1} parent=23 // pred_check
          %p2235 = pneg %p78
        $region30: #{tpu_custom_call.1} parent=23 // pred_check_branch
          %2237 = sbr.rel (%p2235) target = $region32
        $region31: #{tpu_custom_call.1} parent=23 // pred_region
          %s2239 = ssub.s32 16384, 16384
          %2240 = vsyncadd %s2231, %s2239
          %s2241 = smul.addr %s22, 128
          %s2242 = sadd.s32 %s23, %s2241
          %s2243 = smul.addr %s2242, 128
          %s2244 = scalar_lea.hbm %s1, %s2243
          %s2245 = sshll.u32 %s2234, 4
          %s2246 = int_to_ptr.vmem [resolvable:$true] %s2245
          %2251 = dma.vmem_to_hbm [thread:$0]  %s2246, 16384, %s2244, %s2231, 128, 128, 8
        $region32: #{tpu_custom_call.1} parent=23 // pred_fallthru
          _
      $region24: #{tpu_custom_call.1} parent=5 // pred_fallthru
        _
      %p2252 = scmp.le.s32.totalorder 2, %s13
      // Predicated region
      $region33: #{tpu_custom_call.1} parent=5 // pred_check
        %p2253 = pneg %p2252
      $region34: #{tpu_custom_call.1} parent=5 // pred_check_branch
        %2255 = sbr.rel (%p2253) target = $region36
      $region35: #{tpu_custom_call.1} parent=5 // pred_region
        %s2256 = ssub.s32 %s13, 2
        // Predicated region
        $region37: #{tpu_custom_call.1} parent=35 // pred_check
          %p2257 = pneg %p84
        $region38: #{tpu_custom_call.1} parent=35 // pred_check_branch
          %2259 = sbr.rel (%p2257) target = $region40
        $region39: #{tpu_custom_call.1} parent=35 // pred_region
          %s2260 = sand.u32 %s69, 1
          %s2261 = scalar_lea.sflag [#allocation4], %s2260
          %s2262 = sand.u32 %s69, 1
          %s2263 = smul.addr %s2262, 1024
          %s2264 = scalar_lea.vmem [#allocation5], %s2263
          %2265 = dma.done %s2261, 16384
        $region40: #{tpu_custom_call.1} parent=35 // pred_fallthru
          _
      $region36: #{tpu_custom_call.1} parent=5 // pred_fallthru
        _
    $region6: #{tpu_custom_call.1} parent=1 // loop_footer
      %s17 = sadd.s32 1, %s13
    $region7: #{tpu_custom_call.1} parent=1 // loop_footer_branch
      %12 = sbr.rel target = $region3
    $region8: #{tpu_custom_call.1} parent=1 // loop_exit
      _
    %2266 = vsyncpa [#allocation3], 1
    %s2267 = scalar_lea.sflag [#allocation3], 1
    %2268 = vsyncpa %s2267, 1
    %2269 = vsyncpa [#allocation4], 1
    %s2270 = scalar_lea.sflag [#allocation4], 1
    %2271 = vsyncpa %s2270, 1

</llo_original>
